<compile_context>
chip_gen: v6e
topology: v6e:2x2x1
jax: 0.10.0
libtpu: 0.0.40
codegen_flags: <defaults>
</compile_context>

<pallas_src>
import jax
import jax.numpy as jnp
from jax.experimental import pallas as pl
from jax.experimental.pallas import tpu as pltpu

NEG_SLOPE = 0.01  # torch.nn.LeakyReLU default


def _leaky_relu(x):
    return jnp.where(x > 0, x, NEG_SLOPE * x)


def _make_kernel(lane_dense_out):
    def kernel(x_ref, w1_ref, b1_ref, w2_ref, b2_ref, w3_ref, b3_ref, o_ref):
        # x_ref: (TB, 784) f32 (streamed).  Cast to bf16 in-kernel for the MXU;
        # w1/w2 are bf16 and VMEM-resident (constant index_maps).
        x = x_ref[...].astype(jnp.bfloat16)
        h1 = jnp.dot(x, w1_ref[...], preferred_element_type=jnp.float32)
        h1 = _leaky_relu(h1 + b1_ref[...])                         # (TB, 512) f32

        h2 = jnp.dot(h1.astype(jnp.bfloat16), w2_ref[...],
                     preferred_element_type=jnp.float32)
        h2 = _leaky_relu(h2 + b2_ref[...])                         # (TB, 256) f32

        # Final 256 -> 1 layer as a VPU multiply + reduction (avoids a
        # lane-sparse N=1 MXU matmul).
        p = h2 * w3_ref[...]                                       # (TB, 256) f32
        if lane_dense_out:
            # Transpose (XLU, otherwise idle) then reduce over sublanes so the
            # scores come out as a lane-dense (1, TB) row -> unmasked stores.
            pt = jnp.transpose(p, (1, 0))                          # (256, TB)
            h3 = jnp.sum(pt, axis=0, keepdims=True) + b3_ref[...]  # (1, TB)
            o_ref[...] = jax.nn.sigmoid(h3)[None]                  # (1, 1, TB)
        else:
            h3 = jnp.sum(p, axis=-1, keepdims=True) + b3_ref[...]  # (TB, 1)
            o_ref[...] = jax.nn.sigmoid(h3)

    return kernel


def prepare_params(params):
    """One-time conversion of f32 (in, out) Linear params into kernel layout.

    Hoisted out of the forward so the weight cast/reshape passes over HBM do
    not run on every call (they are not hidden behind the kernel's pipeline).
    """
    w1, b1, w2, b2, w3, b3 = params
    return (w1.astype(jnp.bfloat16),                   # (784, 512) bf16
            b1.reshape(1, -1).astype(jnp.float32),     # (1, 512)   f32
            w2.astype(jnp.bfloat16),                   # (512, 256) bf16
            b2.reshape(1, -1).astype(jnp.float32),     # (1, 256)   f32
            w3.reshape(1, -1).astype(jnp.float32),     # (1, 256)   f32 row
            b3.reshape(1, 1).astype(jnp.float32))      # (1, 1)     f32


def discriminator_forward(img, prepared_params, *, block_b=1024):
    """img: (B, 1, 28, 28) (or (B, 784)) float. Returns (B, 1) sigmoid scores.

    `prepared_params` must come from prepare_params() (kernel layout)."""
    w1, b1, w2, b2, w3, b3 = prepared_params
    image_size, h1_dim = w1.shape                      # 784, 512
    h2_dim = w2.shape[1]                               # 256

    x = img.reshape(-1, image_size).astype(jnp.float32)   # == img.view(-1, 784)
    B = x.shape[0]

    # Batch tile: multiple of 8, clamped for tiny batches so we never run the
    # MXU on ~99% padding rows at inference batch sizes.
    block_b = max(8, (block_b // 8) * 8)
    block_b_eff = min(block_b, 8 * pl.cdiv(B, 8))
    # For large batches make sure the grid has >= 2 tiles so ("parallel",) can
    # shard across v7x's two TensorCores (harmless on single-TC v5e / v6e).
    if B >= 256 and 2 * block_b_eff > 8 * pl.cdiv(B, 8):
        block_b_eff = 8 * pl.cdiv(pl.cdiv(B, 2), 8)

    b_pad = block_b_eff * pl.cdiv(B, block_b_eff)
    n_tiles = b_pad // block_b_eff
    if b_pad != B:
        x = jnp.pad(x, ((0, b_pad - B), (0, 0)))

    # Lane-dense output path only when the tile is a clean 128 multiple.
    lane_dense = (block_b_eff % 128 == 0)

    in_specs = [
        pl.BlockSpec((block_b_eff, image_size), lambda i: (i, 0)),  # x (streamed)
        pl.BlockSpec((image_size, h1_dim), lambda i: (0, 0)),       # W1 (resident)
        pl.BlockSpec((1, h1_dim), lambda i: (0, 0)),                # b1
        pl.BlockSpec((h1_dim, h2_dim), lambda i: (0, 0)),           # W2
        pl.BlockSpec((1, h2_dim), lambda i: (0, 0)),                # b2
        pl.BlockSpec((1, h2_dim), lambda i: (0, 0)),                # w3 row
        pl.BlockSpec((1, 1), lambda i: (0, 0)),                     # b3
    ]
    if lane_dense:
        out_shape = jax.ShapeDtypeStruct((n_tiles, 1, block_b_eff), jnp.float32)
        out_spec = pl.BlockSpec((1, 1, block_b_eff), lambda i: (i, 0, 0))
    else:
        out_shape = jax.ShapeDtypeStruct((b_pad, 1), jnp.float32)
        out_spec = pl.BlockSpec((block_b_eff, 1), lambda i: (i, 0))

    flops = 2 * b_pad * (image_size * h1_dim + h1_dim * h2_dim + h2_dim)
    bytes_accessed = (b_pad * image_size * 4            # x streamed as f32
                      + w1.size * 2 + w2.size * 2       # bf16 weights (once)
                      + (b1.size + b2.size + w3.size + b3.size) * 4
                      + b_pad * 4)                      # output
    cost = pl.CostEstimate(flops=int(flops), transcendentals=int(b_pad),
                           bytes_accessed=int(bytes_accessed))

    out = pl.pallas_call(
        _make_kernel(lane_dense),
        out_shape=out_shape,
        grid=(n_tiles,),
        in_specs=in_specs,
        out_specs=out_spec,
        compiler_params=pltpu.CompilerParams(
            dimension_semantics=("parallel",)),
        cost_estimate=cost,
    )(x, w1, b1, w2, b2, w3, b3)

    if lane_dense:
        out = out.reshape(b_pad, 1)
    return out[:B]


def init_params(key, image_size=784):
    """Deterministic init matching nn.Linear default: U(-1/sqrt(in), 1/sqrt(in)).
    Weights stored transposed, as (in_features, out_features), f32."""
    dims = [(image_size, 512), (512, 256), (256, 1)]
    params = []
    for i, (fan_in, fan_out) in enumerate(dims):
        kw, kb = jax.random.split(jax.random.fold_in(key, i))
        bound = 1.0 / (fan_in ** 0.5)
        w = jax.random.uniform(kw, (fan_in, fan_out), jnp.float32, -bound, bound)
        b = jax.random.uniform(kb, (1, fan_out), jnp.float32, -bound, bound)
        params += [w, b]
    return tuple(params)


def reference_forward(img, params):
    """Plain-JAX f32 reference."""
    w1, b1, w2, b2, w3, b3 = params
    x = img.reshape(-1, w1.shape[0])
    h = _leaky_relu(x @ w1 + b1)
    h = _leaky_relu(h @ w2 + b2)
    return jax.nn.sigmoid(h @ w3 + b3)


if __name__ == "__main__":
    key = jax.random.PRNGKey(0)
    k_img, k_par = jax.random.split(key)

    image_size = 784
    params = init_params(k_par, image_size)
    prep = prepare_params(params)          # one-time kernel-layout conversion

    fwd = jax.jit(discriminator_forward)

    # Tiny inference-style batch: exercises the clamped single-tile column path.
    img_small = jax.random.normal(k_img, (2, 1, 28, 28), jnp.float32)  # NCHW MNIST
    out_small = jax.block_until_ready(fwd(img_small, prep))
    ref_small = reference_forward(img_small, params)
    assert out_small.shape == (2, 1)
    # bf16 MXU operands -> loosened tolerance vs the f32 reference.
    assert jnp.allclose(out_small, ref_small, atol=2e-2, rtol=2e-2)

    # Training-style batch: exercises the multi-tile, lane-dense-output path.
    img_big = jax.random.normal(jax.random.fold_in(k_img, 1),
                                (256, 1, 28, 28), jnp.float32)
    out_big = jax.block_until_ready(fwd(img_big, prep))
    ref_big = reference_forward(img_big, params)
    assert out_big.shape == (256, 1)
    assert jnp.allclose(out_big, ref_big, atol=2e-2, rtol=2e-2)

    print("KERNEL_OK")
</pallas_src>

<mosaic_0001>
module attributes {stable_mosaic.version = 11 : i64} {
  func.func @kernel(%arg0: i32, %arg1: memref<8x784xf32, #tpu.memory_space<vmem>>, %arg2: memref<784x512xbf16, #tpu.memory_space<vmem>>, %arg3: memref<1x512xf32, #tpu.memory_space<vmem>>, %arg4: memref<512x256xbf16, #tpu.memory_space<vmem>>, %arg5: memref<1x256xf32, #tpu.memory_space<vmem>>, %arg6: memref<1x256xf32, #tpu.memory_space<vmem>>, %arg7: memref<1x1xf32, #tpu.memory_space<vmem>>, %arg8: memref<8x1xf32, #tpu.memory_space<vmem>>) attributes {dimension_semantics = [#tpu.dimension_semantics<parallel>], iteration_bounds = array<i64: 1>, scalar_prefetch = 0 : i64, scratch_operands = 0 : i64, tpu.core_type = #tpu.core_type<tc>, window_params = [{transform_indices = @transform_0, window_bounds = array<i64: 8, 784>}, {pipeline_mode = #tpu.pipeline_mode<synchronous>, transform_indices = @transform_1, window_bounds = array<i64: 784, 512>}, {pipeline_mode = #tpu.pipeline_mode<synchronous>, transform_indices = @transform_2, window_bounds = array<i64: 1, 512>}, {pipeline_mode = #tpu.pipeline_mode<synchronous>, transform_indices = @transform_3, window_bounds = array<i64: 512, 256>}, {pipeline_mode = #tpu.pipeline_mode<synchronous>, transform_indices = @transform_4, window_bounds = array<i64: 1, 256>}, {pipeline_mode = #tpu.pipeline_mode<synchronous>, transform_indices = @transform_5, window_bounds = array<i64: 1, 256>}, {pipeline_mode = #tpu.pipeline_mode<synchronous>, transform_indices = @transform_6, window_bounds = array<i64: 1, 1>}, {transform_indices = @transform_7, window_bounds = array<i64: 8, 1>}]} {
    %c0 = arith.constant 0 : index
    %c0_0 = arith.constant 0 : index
    %0 = vector.load %arg1[%c0, %c0_0] : memref<8x784xf32, #tpu.memory_space<vmem>>, vector<8x784xf32>
    %1 = arith.truncf %0 : vector<8x784xf32> to vector<8x784xbf16>
    %c0_1 = arith.constant 0 : index
    %c0_2 = arith.constant 0 : index
    %2 = vector.load %arg2[%c0_1, %c0_2] : memref<784x512xbf16, #tpu.memory_space<vmem>>, vector<784x512xbf16>
    %cst = arith.constant dense<0.000000e+00> : vector<8x512xf32>
    %3 = tpu.matmul %1, %2, %cst {dimension_numbers = #tpu.dot_dimension_numbers<[1], [0], [0], [1], [0, 0, 1, 1], [], []>} : vector<8x784xbf16>, vector<784x512xbf16>, vector<8x512xf32> -> vector<8x512xf32>
    %c0_3 = arith.constant 0 : index
    %c0_4 = arith.constant 0 : index
    %4 = vector.load %arg3[%c0_3, %c0_4] : memref<1x512xf32, #tpu.memory_space<vmem>>, vector<1x512xf32>
    %5 = vector.broadcast %4 : vector<1x512xf32> to vector<8x512xf32>
    %6 = arith.addf %3, %5 : vector<8x512xf32>
    %cst_5 = arith.constant 0.000000e+00 : f32
    %7 = vector.broadcast %cst_5 : f32 to vector<8x512xf32>
    %8 = arith.cmpf ogt, %6, %7 : vector<8x512xf32>
    %cst_6 = arith.constant 0.00999999977 : f32
    %9 = vector.broadcast %cst_6 : f32 to vector<8x512xf32>
    %10 = arith.mulf %9, %6 : vector<8x512xf32>
    %11 = arith.select %8, %6, %10 : vector<8x512xi1>, vector<8x512xf32>
    %12 = arith.truncf %11 : vector<8x512xf32> to vector<8x512xbf16>
    %c0_7 = arith.constant 0 : index
    %c0_8 = arith.constant 0 : index
    %13 = vector.load %arg4[%c0_7, %c0_8] : memref<512x256xbf16, #tpu.memory_space<vmem>>, vector<512x256xbf16>
    %cst_9 = arith.constant dense<0.000000e+00> : vector<8x256xf32>
    %14 = tpu.matmul %12, %13, %cst_9 {dimension_numbers = #tpu.dot_dimension_numbers<[1], [0], [0], [1], [0, 0, 1, 1], [], []>} : vector<8x512xbf16>, vector<512x256xbf16>, vector<8x256xf32> -> vector<8x256xf32>
    %c0_10 = arith.constant 0 : index
    %c0_11 = arith.constant 0 : index
    %15 = vector.load %arg5[%c0_10, %c0_11] : memref<1x256xf32, #tpu.memory_space<vmem>>, vector<1x256xf32>
    %16 = vector.broadcast %15 : vector<1x256xf32> to vector<8x256xf32>
    %17 = arith.addf %14, %16 : vector<8x256xf32>
    %cst_12 = arith.constant 0.000000e+00 : f32
    %18 = vector.broadcast %cst_12 : f32 to vector<8x256xf32>
    %19 = arith.cmpf ogt, %17, %18 : vector<8x256xf32>
    %cst_13 = arith.constant 0.00999999977 : f32
    %20 = vector.broadcast %cst_13 : f32 to vector<8x256xf32>
    %21 = arith.mulf %20, %17 : vector<8x256xf32>
    %22 = arith.select %19, %17, %21 : vector<8x256xi1>, vector<8x256xf32>
    %c0_14 = arith.constant 0 : index
    %c0_15 = arith.constant 0 : index
    %23 = vector.load %arg6[%c0_14, %c0_15] : memref<1x256xf32, #tpu.memory_space<vmem>>, vector<1x256xf32>
    %24 = vector.broadcast %23 : vector<1x256xf32> to vector<8x256xf32>
    %25 = arith.mulf %22, %24 : vector<8x256xf32>
    %cst_16 = arith.constant dense<0.000000e+00> : vector<8xf32>
    %26 = vector.multi_reduction <add>, %25, %cst_16 [1] : vector<8x256xf32> to vector<8xf32>
    %27 = vector.shape_cast %26 : vector<8xf32> to vector<8x1xf32>
    %c0_17 = arith.constant 0 : index
    %c0_18 = arith.constant 0 : index
    %28 = vector.load %arg7[%c0_17, %c0_18] : memref<1x1xf32, #tpu.memory_space<vmem>>, vector<1x1xf32>
    %29 = vector.broadcast %28 : vector<1x1xf32> to vector<8x1xf32>
    %30 = arith.addf %27, %29 : vector<8x1xf32>
    %31 = arith.negf %30 : vector<8x1xf32>
    %32 = math.exp %31 : vector<8x1xf32>
    %cst_19 = arith.constant 1.000000e+00 : f32
    %33 = vector.broadcast %cst_19 : f32 to vector<8x1xf32>
    %34 = arith.addf %33, %32 : vector<8x1xf32>
    %35 = arith.divf %33, %34 : vector<8x1xf32>
    %c0_20 = arith.constant 0 : index
    %c0_21 = arith.constant 0 : index
    %36 = vector.load %arg8[%c0_20, %c0_21] : memref<8x1xf32, #tpu.memory_space<vmem>>, vector<8x1xf32>
    tpu.vector_store %arg8[%c0_20, %c0_21], %35 {strides = array<i32>} : memref<8x1xf32, #tpu.memory_space<vmem>>, vector<8x1xf32>,
    return
  }
  func.func @transform_0(%arg0: i32) -> (i32, i32) {
    %c0_i32 = arith.constant 0 : i32
    %c0_i32_0 = arith.constant 0 : i32
    return %arg0, %c0_i32 : i32, i32
  }
  func.func @transform_1(%arg0: i32) -> (i32, i32) {
    %c0_i32 = arith.constant 0 : i32
    %c0_i32_0 = arith.constant 0 : i32
    %c0_i32_1 = arith.constant 0 : i32
    return %c0_i32, %c0_i32_0 : i32, i32
  }
  func.func @transform_2(%arg0: i32) -> (i32, i32) {
    %c0_i32 = arith.constant 0 : i32
    %c0_i32_0 = arith.constant 0 : i32
    %c0_i32_1 = arith.constant 0 : i32
    return %c0_i32, %c0_i32_0 : i32, i32
  }
  func.func @transform_3(%arg0: i32) -> (i32, i32) {
    %c0_i32 = arith.constant 0 : i32
    %c0_i32_0 = arith.constant 0 : i32
    %c0_i32_1 = arith.constant 0 : i32
    return %c0_i32, %c0_i32_0 : i32, i32
  }
  func.func @transform_4(%arg0: i32) -> (i32, i32) {
    %c0_i32 = arith.constant 0 : i32
    %c0_i32_0 = arith.constant 0 : i32
    %c0_i32_1 = arith.constant 0 : i32
    return %c0_i32, %c0_i32_0 : i32, i32
  }
  func.func @transform_5(%arg0: i32) -> (i32, i32) {
    %c0_i32 = arith.constant 0 : i32
    %c0_i32_0 = arith.constant 0 : i32
    %c0_i32_1 = arith.constant 0 : i32
    return %c0_i32, %c0_i32_0 : i32, i32
  }
  func.func @transform_6(%arg0: i32) -> (i32, i32) {
    %c0_i32 = arith.constant 0 : i32
    %c0_i32_0 = arith.constant 0 : i32
    %c0_i32_1 = arith.constant 0 : i32
    return %c0_i32, %c0_i32_0 : i32, i32
  }
  func.func @transform_7(%arg0: i32) -> (i32, i32) {
    %c0_i32 = arith.constant 0 : i32
    %c0_i32_0 = arith.constant 0 : i32
    return %arg0, %c0_i32 : i32, i32
  }
}

</mosaic_0001>

<llo_original>
// kernel: discriminator_forward.1
$region0: #{discriminator_forward.1}
  #allocation0 [shape = 'u32[]', space=smem, size = 0x4, offset = 0x4, fixed_abs, tag = 'smem constant byte address 0x4 - core index']
  #allocation1 [shape = 'u32[144,128]{1,0:T(1,128)}', space=vmem, size = 0x12000, scoped, tag = 'internal scratch']
  #allocation2 [shape = 'f32[1,1]{1,0:T(1,128)S(1)}', space=vmem, size = 0x200, scoped, tag = 'scoped memory for discriminator_forward.1']
  %s0 = inlined_call_operand.vmem [shape: f32[8,784], index: 0, kind: input, shape index: {}]
  %s1 = inlined_call_operand.hbm [shape: bf16[784,512], index: 1, kind: input, shape index: {}]
  %s2 = inlined_call_operand.vmem [shape: f32[1,512], index: 2, kind: input, shape index: {}]
  %s3 = inlined_call_operand.hbm [shape: bf16[512,256], index: 3, kind: input, shape index: {}]
  %s4 = inlined_call_operand.vmem [shape: f32[1,256], index: 4, kind: input, shape index: {}]
  %s5 = inlined_call_operand.vmem [shape: f32[1,256], index: 5, kind: input, shape index: {}]
  %s6 = inlined_call_operand.<no memory space> [shape: f32[1,1], index: 6, kind: input, shape index: {}]
  %s7 = inlined_call_operand.vmem [shape: f32[8,1], index: 7, kind: output, shape index: {}]
  %s8 = sld [smem:[#allocation0]]
  $region46: #{discriminator_forward.1} parent=0
    _
  %s10 = ssub.s32 1, %s8
  %s11 = scalar_select 0, %s10, %s8
  %v12 = vstv %s6
  %13 = vst [vmem:[#allocation2] sm:$0x1] %v12
  $region1: #{discriminator_forward.1} parent=0
    #allocation3 [shape = 'u8[802816]{0}', space=vmem, size = 0xc4000, scoped, tag = 'input window, operand 1, single buffered']
    #allocation4 [shape = 's32[1]{0}', space=sflag, size = 0x4, scoped, tag = 'scoped memory for discriminator_forward.1']
    #allocation5 [shape = 'u8[262144]{0}', space=vmem, size = 0x40000, scoped, tag = 'input window, operand 3, single buffered']
    #allocation6 [shape = 's32[1]{0}', space=sflag, size = 0x4, scoped, tag = 'scoped memory for discriminator_forward.1']
    %14 = vsyncpa [#allocation4], 0
    %15 = vsyncpa [#allocation6], 0
    // Predicated region
    $region2: #{discriminator_forward.1} parent=1 // pred_check
      _
    $region3: #{discriminator_forward.1} parent=1 // pred_check_branch
      %17 = sbr.rel (0) target = $region5
    $region4: #{discriminator_forward.1} parent=1 // pred_region
      _
    $region5: #{discriminator_forward.1} parent=1 // pred_fallthru
      _
    // Predicated region
    $region6: #{discriminator_forward.1} parent=1 // pred_check
      _
    $region7: #{discriminator_forward.1} parent=1 // pred_check_branch
      %19 = sbr.rel (0) target = $region9
    $region8: #{discriminator_forward.1} parent=1 // pred_region
      %s21 = ssub.s32 25088, 25088
      %22 = vsyncadd [#allocation4], %s21
      %s23 = sshll.u32 [#allocation3], 4
      %s24 = int_to_ptr.vmem [resolvable:$true] %s23
      %29 = dma.hbm_to_vmem [thread:$0]  %s1, 25088, %s24, [#allocation4], 256, 256, 16
    $region9: #{discriminator_forward.1} parent=1 // pred_fallthru
      _
    // Predicated region
    $region10: #{discriminator_forward.1} parent=1 // pred_check
      _
    $region11: #{discriminator_forward.1} parent=1 // pred_check_branch
      %31 = sbr.rel (0) target = $region13
    $region12: #{discriminator_forward.1} parent=1 // pred_region
      _
    $region13: #{discriminator_forward.1} parent=1 // pred_fallthru
      _
    // Predicated region
    $region14: #{discriminator_forward.1} parent=1 // pred_check
      _
    $region15: #{discriminator_forward.1} parent=1 // pred_check_branch
      %33 = sbr.rel (0) target = $region17
    $region16: #{discriminator_forward.1} parent=1 // pred_region
      %s35 = ssub.s32 8192, 8192
      %36 = vsyncadd [#allocation6], %s35
      %s37 = sshll.u32 [#allocation5], 4
      %s38 = int_to_ptr.vmem [resolvable:$true] %s37
      %43 = dma.hbm_to_vmem [thread:$0]  %s3, 8192, %s38, [#allocation6], 128, 128, 8
    $region17: #{discriminator_forward.1} parent=1 // pred_fallthru
      _
    // Predicated region
    $region18: #{discriminator_forward.1} parent=1 // pred_check
      _
    $region19: #{discriminator_forward.1} parent=1 // pred_check_branch
      %45 = sbr.rel (0) target = $region21
    $region20: #{discriminator_forward.1} parent=1 // pred_region
      _
    $region21: #{discriminator_forward.1} parent=1 // pred_fallthru
      _
    // Predicated region
    $region22: #{discriminator_forward.1} parent=1 // pred_check
      _
    $region23: #{discriminator_forward.1} parent=1 // pred_check_branch
      %47 = sbr.rel (0) target = $region25
    $region24: #{discriminator_forward.1} parent=1 // pred_region
      _
    $region25: #{discriminator_forward.1} parent=1 // pred_fallthru
      _
    // Predicated region
    $region26: #{discriminator_forward.1} parent=1 // pred_check
      _
    $region27: #{discriminator_forward.1} parent=1 // pred_check_branch
      %49 = sbr.rel (0) target = $region29
    $region28: #{discriminator_forward.1} parent=1 // pred_region
      _
    $region29: #{discriminator_forward.1} parent=1 // pred_fallthru
      _
    // Predicated region
    $region30: #{discriminator_forward.1} parent=1 // pred_check
      _
    $region31: #{discriminator_forward.1} parent=1 // pred_check_branch
      %51 = sbr.rel (0) target = $region33
    $region32: #{discriminator_forward.1} parent=1 // pred_region
      %52 = dma.done [#allocation4], 25088
    $region33: #{discriminator_forward.1} parent=1 // pred_fallthru
      _
    // Predicated region
    $region34: #{discriminator_forward.1} parent=1 // pred_check
      _
    $region35: #{discriminator_forward.1} parent=1 // pred_check_branch
      %54 = sbr.rel (0) target = $region37
    $region36: #{discriminator_forward.1} parent=1 // pred_region
      %55 = dma.done [#allocation6], 8192
    $region37: #{discriminator_forward.1} parent=1 // pred_fallthru
      _
    %v57 = vld [vmem:[%s0] sm:$0xff]
    %v58 = vld [vmem:[%s0 + $0x8] sm:$0xff]
    %v59 = vld [vmem:[%s0 + $0x10] sm:$0xff]
    %v60 = vld [vmem:[%s0 + $0x18] sm:$0xff]
    %v61 = vld [vmem:[%s0 + $0x20] sm:$0xff]
    %v62 = vld [vmem:[%s0 + $0x28] sm:$0xff]
    %v63 = vld [vmem:[%s0 + $0x30] sm:$0xff]
    %v64 = vpack.c.bf16 %v57, %v57
    %v65 = vpack.c.bf16 %v58, %v58
    %v66 = vpack.c.bf16 %v59, %v59
    %v67 = vpack.c.bf16 %v60, %v60
    %v68 = vpack.c.bf16 %v61, %v61
    %v69 = vpack.c.bf16 %v62, %v62
    %v70 = vpack.c.bf16 %v63, %v63
    %v71 = vld [vmem:[#allocation3] sm:$0xff]
    %v72 = vld [vmem:[#allocation3 + $0x8] sm:$0xff]
    %v73 = vld [vmem:[#allocation3 + $0x10] sm:$0xff]
    %v74 = vld [vmem:[#allocation3 + $0x18] sm:$0xff]
    %v75 = vld [vmem:[#allocation3 + $0x20] sm:$0xff]
    %v76 = vld [vmem:[#allocation3 + $0x28] sm:$0xff]
    %v77 = vld [vmem:[#allocation3 + $0x30] sm:$0xff]
    %v78 = vld [vmem:[#allocation3 + $0x38] sm:$0xff]
    %v79 = vld [vmem:[#allocation3 + $0x40] sm:$0xff]
    %v80 = vld [vmem:[#allocation3 + $0x48] sm:$0xff]
    %v81 = vld [vmem:[#allocation3 + $0x50] sm:$0xff]
    %v82 = vld [vmem:[#allocation3 + $0x58] sm:$0xff]
    %v83 = vld [vmem:[#allocation3 + $0x60] sm:$0xff]
    %v84 = vld [vmem:[#allocation3 + $0x68] sm:$0xff]
    %v85 = vld [vmem:[#allocation3 + $0x70] sm:$0xff]
    %v86 = vld [vmem:[#allocation3 + $0x78] sm:$0xff]
    %v87 = vld [vmem:[#allocation3 + $0x80] sm:$0xff]
    %v88 = vld [vmem:[#allocation3 + $0x88] sm:$0xff]
    %v89 = vld [vmem:[#allocation3 + $0x90] sm:$0xff]
    %v90 = vld [vmem:[#allocation3 + $0x98] sm:$0xff]
    %v91 = vld [vmem:[#allocation3 + $0xa0] sm:$0xff]
    %v92 = vld [vmem:[#allocation3 + $0xa8] sm:$0xff]
    %v93 = vld [vmem:[#allocation3 + $0xb0] sm:$0xff]
    %v94 = vld [vmem:[#allocation3 + $0xb8] sm:$0xff]
    %v95 = vld [vmem:[#allocation3 + $0xc0] sm:$0xff]
    %v96 = vld [vmem:[#allocation3 + $0xc8] sm:$0xff]
    %v97 = vld [vmem:[#allocation3 + $0xd0] sm:$0xff]
    %v98 = vld [vmem:[#allocation3 + $0xd8] sm:$0xff]
    %v99 = vld [vmem:[#allocation3 + $0xe0] sm:$0xff]
    %v100 = vld [vmem:[#allocation3 + $0xe8] sm:$0xff]
    %v101 = vld [vmem:[#allocation3 + $0xf0] sm:$0xff]
    %v102 = vld [vmem:[#allocation3 + $0xf8] sm:$0xff]
    %v103 = vld [vmem:[#allocation3 + $0x100] sm:$0xff]
    %v104 = vld [vmem:[#allocation3 + $0x108] sm:$0xff]
    %v105 = vld [vmem:[#allocation3 + $0x110] sm:$0xff]
    %v106 = vld [vmem:[#allocation3 + $0x118] sm:$0xff]
    %v107 = vld [vmem:[#allocation3 + $0x120] sm:$0xff]
    %v108 = vld [vmem:[#allocation3 + $0x128] sm:$0xff]
    %v109 = vld [vmem:[#allocation3 + $0x130] sm:$0xff]
    %v110 = vld [vmem:[#allocation3 + $0x138] sm:$0xff]
    %v111 = vld [vmem:[#allocation3 + $0x140] sm:$0xff]
    %v112 = vld [vmem:[#allocation3 + $0x148] sm:$0xff]
    %v113 = vld [vmem:[#allocation3 + $0x150] sm:$0xff]
    %v114 = vld [vmem:[#allocation3 + $0x158] sm:$0xff]
    %v115 = vld [vmem:[#allocation3 + $0x160] sm:$0xff]
    %v116 = vld [vmem:[#allocation3 + $0x168] sm:$0xff]
    %v117 = vld [vmem:[#allocation3 + $0x170] sm:$0xff]
    %v118 = vld [vmem:[#allocation3 + $0x178] sm:$0xff]
    %v119 = vld [vmem:[#allocation3 + $0x180] sm:$0xff]
    %v120 = vld [vmem:[#allocation3 + $0x188] sm:$0xff]
    %v121 = vld [vmem:[#allocation3 + $0x190] sm:$0xff]
    %v122 = vld [vmem:[#allocation3 + $0x198] sm:$0xff]
    %v123 = vld [vmem:[#allocation3 + $0x1a0] sm:$0xff]
    %v124 = vld [vmem:[#allocation3 + $0x1a8] sm:$0xff]
    %v125 = vld [vmem:[#allocation3 + $0x1b0] sm:$0xff]
    %v126 = vld [vmem:[#allocation3 + $0x1b8] sm:$0xff]
    %v127 = vld [vmem:[#allocation3 + $0x1c0] sm:$0xff]
    %v128 = vld [vmem:[#allocation3 + $0x1c8] sm:$0xff]
    %v129 = vld [vmem:[#allocation3 + $0x1d0] sm:$0xff]
    %v130 = vld [vmem:[#allocation3 + $0x1d8] sm:$0xff]
    %v131 = vld [vmem:[#allocation3 + $0x1e0] sm:$0xff]
    %v132 = vld [vmem:[#allocation3 + $0x1e8] sm:$0xff]
    %v133 = vld [vmem:[#allocation3 + $0x1f0] sm:$0xff]
    %v134 = vld [vmem:[#allocation3 + $0x1f8] sm:$0xff]
    %v135 = vld [vmem:[#allocation3 + $0x200] sm:$0xff]
    %v136 = vld [vmem:[#allocation3 + $0x208] sm:$0xff]
    %v137 = vld [vmem:[#allocation3 + $0x210] sm:$0xff]
    %v138 = vld [vmem:[#allocation3 + $0x218] sm:$0xff]
    %v139 = vld [vmem:[#allocation3 + $0x220] sm:$0xff]
    %v140 = vld [vmem:[#allocation3 + $0x228] sm:$0xff]
    %v141 = vld [vmem:[#allocation3 + $0x230] sm:$0xff]
    %v142 = vld [vmem:[#allocation3 + $0x238] sm:$0xff]
    %v143 = vld [vmem:[#allocation3 + $0x240] sm:$0xff]
    %v144 = vld [vmem:[#allocation3 + $0x248] sm:$0xff]
    %v145 = vld [vmem:[#allocation3 + $0x250] sm:$0xff]
    %v146 = vld [vmem:[#allocation3 + $0x258] sm:$0xff]
    %v147 = vld [vmem:[#allocation3 + $0x260] sm:$0xff]
    %v148 = vld [vmem:[#allocation3 + $0x268] sm:$0xff]
    %v149 = vld [vmem:[#allocation3 + $0x270] sm:$0xff]
    %v150 = vld [vmem:[#allocation3 + $0x278] sm:$0xff]
    %v151 = vld [vmem:[#allocation3 + $0x280] sm:$0xff]
    %v152 = vld [vmem:[#allocation3 + $0x288] sm:$0xff]
    %v153 = vld [vmem:[#allocation3 + $0x290] sm:$0xff]
    %v154 = vld [vmem:[#allocation3 + $0x298] sm:$0xff]
    %v155 = vld [vmem:[#allocation3 + $0x2a0] sm:$0xff]
    %v156 = vld [vmem:[#allocation3 + $0x2a8] sm:$0xff]
    %v157 = vld [vmem:[#allocation3 + $0x2b0] sm:$0xff]
    %v158 = vld [vmem:[#allocation3 + $0x2b8] sm:$0xff]
    %v159 = vld [vmem:[#allocation3 + $0x2c0] sm:$0xff]
    %v160 = vld [vmem:[#allocation3 + $0x2c8] sm:$0xff]
    %v161 = vld [vmem:[#allocation3 + $0x2d0] sm:$0xff]
    %v162 = vld [vmem:[#allocation3 + $0x2d8] sm:$0xff]
    %v163 = vld [vmem:[#allocation3 + $0x2e0] sm:$0xff]
    %v164 = vld [vmem:[#allocation3 + $0x2e8] sm:$0xff]
    %v165 = vld [vmem:[#allocation3 + $0x2f0] sm:$0xff]
    %v166 = vld [vmem:[#allocation3 + $0x2f8] sm:$0xff]
    %v167 = vld [vmem:[#allocation3 + $0x300] sm:$0xff]
    %v168 = vld [vmem:[#allocation3 + $0x308] sm:$0xff]
    %v169 = vld [vmem:[#allocation3 + $0x310] sm:$0xff]
    %v170 = vld [vmem:[#allocation3 + $0x318] sm:$0xff]
    %v171 = vld [vmem:[#allocation3 + $0x320] sm:$0xff]
    %v172 = vld [vmem:[#allocation3 + $0x328] sm:$0xff]
    %v173 = vld [vmem:[#allocation3 + $0x330] sm:$0xff]
    %v174 = vld [vmem:[#allocation3 + $0x338] sm:$0xff]
    %v175 = vld [vmem:[#allocation3 + $0x340] sm:$0xff]
    %v176 = vld [vmem:[#allocation3 + $0x348] sm:$0xff]
    %v177 = vld [vmem:[#allocation3 + $0x350] sm:$0xff]
    %v178 = vld [vmem:[#allocation3 + $0x358] sm:$0xff]
    %v179 = vld [vmem:[#allocation3 + $0x360] sm:$0xff]
    %v180 = vld [vmem:[#allocation3 + $0x368] sm:$0xff]
    %v181 = vld [vmem:[#allocation3 + $0x370] sm:$0xff]
    %v182 = vld [vmem:[#allocation3 + $0x378] sm:$0xff]
    %v183 = vld [vmem:[#allocation3 + $0x380] sm:$0xff]
    %v184 = vld [vmem:[#allocation3 + $0x388] sm:$0xff]
    %v185 = vld [vmem:[#allocation3 + $0x390] sm:$0xff]
    %v186 = vld [vmem:[#allocation3 + $0x398] sm:$0xff]
    %v187 = vld [vmem:[#allocation3 + $0x3a0] sm:$0xff]
    %v188 = vld [vmem:[#allocation3 + $0x3a8] sm:$0xff]
    %v189 = vld [vmem:[#allocation3 + $0x3b0] sm:$0xff]
    %v190 = vld [vmem:[#allocation3 + $0x3b8] sm:$0xff]
    %v191 = vld [vmem:[#allocation3 + $0x3c0] sm:$0xff]
    %v192 = vld [vmem:[#allocation3 + $0x3c8] sm:$0xff]
    %v193 = vld [vmem:[#allocation3 + $0x3d0] sm:$0xff]
    %v194 = vld [vmem:[#allocation3 + $0x3d8] sm:$0xff]
    %v195 = vld [vmem:[#allocation3 + $0x3e0] sm:$0xff]
    %v196 = vld [vmem:[#allocation3 + $0x3e8] sm:$0xff]
    %v197 = vld [vmem:[#allocation3 + $0x3f0] sm:$0xff]
    %v198 = vld [vmem:[#allocation3 + $0x3f8] sm:$0xff]
    %v199 = vld [vmem:[#allocation3 + $0x400] sm:$0xff]
    %v200 = vld [vmem:[#allocation3 + $0x408] sm:$0xff]
    %v201 = vld [vmem:[#allocation3 + $0x410] sm:$0xff]
    %v202 = vld [vmem:[#allocation3 + $0x418] sm:$0xff]
    %v203 = vld [vmem:[#allocation3 + $0x420] sm:$0xff]
    %v204 = vld [vmem:[#allocation3 + $0x428] sm:$0xff]
    %v205 = vld [vmem:[#allocation3 + $0x430] sm:$0xff]
    %v206 = vld [vmem:[#allocation3 + $0x438] sm:$0xff]
    %v207 = vld [vmem:[#allocation3 + $0x440] sm:$0xff]
    %v208 = vld [vmem:[#allocation3 + $0x448] sm:$0xff]
    %v209 = vld [vmem:[#allocation3 + $0x450] sm:$0xff]
    %v210 = vld [vmem:[#allocation3 + $0x458] sm:$0xff]
    %v211 = vld [vmem:[#allocation3 + $0x460] sm:$0xff]
    %v212 = vld [vmem:[#allocation3 + $0x468] sm:$0xff]
    %v213 = vld [vmem:[#allocation3 + $0x470] sm:$0xff]
    %v214 = vld [vmem:[#allocation3 + $0x478] sm:$0xff]
    %v215 = vld [vmem:[#allocation3 + $0x480] sm:$0xff]
    %v216 = vld [vmem:[#allocation3 + $0x488] sm:$0xff]
    %v217 = vld [vmem:[#allocation3 + $0x490] sm:$0xff]
    %v218 = vld [vmem:[#allocation3 + $0x498] sm:$0xff]
    %v219 = vld [vmem:[#allocation3 + $0x4a0] sm:$0xff]
    %v220 = vld [vmem:[#allocation3 + $0x4a8] sm:$0xff]
    %v221 = vld [vmem:[#allocation3 + $0x4b0] sm:$0xff]
    %v222 = vld [vmem:[#allocation3 + $0x4b8] sm:$0xff]
    %v223 = vld [vmem:[#allocation3 + $0x4c0] sm:$0xff]
    %v224 = vld [vmem:[#allocation3 + $0x4c8] sm:$0xff]
    %v225 = vld [vmem:[#allocation3 + $0x4d0] sm:$0xff]
    %v226 = vld [vmem:[#allocation3 + $0x4d8] sm:$0xff]
    %v227 = vld [vmem:[#allocation3 + $0x4e0] sm:$0xff]
    %v228 = vld [vmem:[#allocation3 + $0x4e8] sm:$0xff]
    %v229 = vld [vmem:[#allocation3 + $0x4f0] sm:$0xff]
    %v230 = vld [vmem:[#allocation3 + $0x4f8] sm:$0xff]
    %v231 = vld [vmem:[#allocation3 + $0x500] sm:$0xff]
    %v232 = vld [vmem:[#allocation3 + $0x508] sm:$0xff]
    %v233 = vld [vmem:[#allocation3 + $0x510] sm:$0xff]
    %v234 = vld [vmem:[#allocation3 + $0x518] sm:$0xff]
    %v235 = vld [vmem:[#allocation3 + $0x520] sm:$0xff]
    %v236 = vld [vmem:[#allocation3 + $0x528] sm:$0xff]
    %v237 = vld [vmem:[#allocation3 + $0x530] sm:$0xff]
    %v238 = vld [vmem:[#allocation3 + $0x538] sm:$0xff]
    %v239 = vld [vmem:[#allocation3 + $0x540] sm:$0xff]
    %v240 = vld [vmem:[#allocation3 + $0x548] sm:$0xff]
    %v241 = vld [vmem:[#allocation3 + $0x550] sm:$0xff]
    %v242 = vld [vmem:[#allocation3 + $0x558] sm:$0xff]
    %v243 = vld [vmem:[#allocation3 + $0x560] sm:$0xff]
    %v244 = vld [vmem:[#allocation3 + $0x568] sm:$0xff]
    %v245 = vld [vmem:[#allocation3 + $0x570] sm:$0xff]
    %v246 = vld [vmem:[#allocation3 + $0x578] sm:$0xff]
    %v247 = vld [vmem:[#allocation3 + $0x580] sm:$0xff]
    %v248 = vld [vmem:[#allocation3 + $0x588] sm:$0xff]
    %v249 = vld [vmem:[#allocation3 + $0x590] sm:$0xff]
    %v250 = vld [vmem:[#allocation3 + $0x598] sm:$0xff]
    %v251 = vld [vmem:[#allocation3 + $0x5a0] sm:$0xff]
    %v252 = vld [vmem:[#allocation3 + $0x5a8] sm:$0xff]
    %v253 = vld [vmem:[#allocation3 + $0x5b0] sm:$0xff]
    %v254 = vld [vmem:[#allocation3 + $0x5b8] sm:$0xff]
    %v255 = vld [vmem:[#allocation3 + $0x5c0] sm:$0xff]
    %v256 = vld [vmem:[#allocation3 + $0x5c8] sm:$0xff]
    %v257 = vld [vmem:[#allocation3 + $0x5d0] sm:$0xff]
    %v258 = vld [vmem:[#allocation3 + $0x5d8] sm:$0xff]
    %v259 = vld [vmem:[#allocation3 + $0x5e0] sm:$0xff]
    %v260 = vld [vmem:[#allocation3 + $0x5e8] sm:$0xff]
    %v261 = vld [vmem:[#allocation3 + $0x5f0] sm:$0xff]
    %v262 = vld [vmem:[#allocation3 + $0x5f8] sm:$0xff]
    %v263 = vld [vmem:[#allocation3 + $0x600] sm:$0xff]
    %v264 = vld [vmem:[#allocation3 + $0x608] sm:$0xff]
    %v265 = vld [vmem:[#allocation3 + $0x610] sm:$0xff]
    %v266 = vld [vmem:[#allocation3 + $0x618] sm:$0xff]
    %v267 = vld [vmem:[%s2] sm:$0xf]
    %v269 = vlaneseq
    %v270 = vshrl.u32 %v269, 7
    %v271 = vsub.s32 0, %v270
    %v272 = vrot.slane %v267, %v271
    %v273 = vlaneseq
    %v274 = vshrl.u32 %v273, 7
    %v275 = vsub.s32 1, %v274
    %v276 = vrot.slane %v267, %v275
    %v277 = vlaneseq
    %v278 = vshrl.u32 %v277, 7
    %v279 = vsub.s32 2, %v278
    %v280 = vrot.slane %v267, %v279
    %v281 = vlaneseq
    %v282 = vshrl.u32 %v281, 7
    %v283 = vsub.s32 3, %v282
    %v284 = vrot.slane %v267, %v283
    %v485 = vunpack.c.l.b16 %v71
    %v486 = vunpack.c.h.b16 %v71
    %v487 = vunpack.c.l.b16 %v72
    %v488 = vunpack.c.h.b16 %v72
    %v489 = vunpack.c.l.b16 %v73
    %v490 = vunpack.c.h.b16 %v73
    %v491 = vunpack.c.l.b16 %v74
    %v492 = vunpack.c.h.b16 %v74
    %v493 = vunpack.c.l.b16 %v75
    %v494 = vunpack.c.h.b16 %v75
    %v495 = vunpack.c.l.b16 %v76
    %v496 = vunpack.c.h.b16 %v76
    %v497 = vunpack.c.l.b16 %v77
    %v498 = vunpack.c.h.b16 %v77
    %v499 = vunpack.c.l.b16 %v78
    %v500 = vunpack.c.h.b16 %v78
    %v501 = vunpack.c.l.b16 %v79
    %v502 = vunpack.c.h.b16 %v79
    %v503 = vunpack.c.l.b16 %v80
    %v504 = vunpack.c.h.b16 %v80
    %v505 = vunpack.c.l.b16 %v81
    %v506 = vunpack.c.h.b16 %v81
    %v507 = vunpack.c.l.b16 %v82
    %v508 = vunpack.c.h.b16 %v82
    %v509 = vunpack.c.l.b16 %v83
    %v510 = vunpack.c.h.b16 %v83
    %v511 = vunpack.c.l.b16 %v84
    %v512 = vunpack.c.h.b16 %v84
    %v513 = vunpack.c.l.b16 %v85
    %v514 = vunpack.c.h.b16 %v85
    %v515 = vunpack.c.l.b16 %v86
    %v516 = vunpack.c.h.b16 %v86
    %v517 = vunpack.c.l.b16 %v87
    %v518 = vunpack.c.h.b16 %v87
    %v519 = vunpack.c.l.b16 %v88
    %v520 = vunpack.c.h.b16 %v88
    %v521 = vunpack.c.l.b16 %v89
    %v522 = vunpack.c.h.b16 %v89
    %v523 = vunpack.c.l.b16 %v90
    %v524 = vunpack.c.h.b16 %v90
    %v525 = vunpack.c.l.b16 %v91
    %v526 = vunpack.c.h.b16 %v91
    %v527 = vunpack.c.l.b16 %v92
    %v528 = vunpack.c.h.b16 %v92
    %v529 = vunpack.c.l.b16 %v93
    %v530 = vunpack.c.h.b16 %v93
    %v531 = vunpack.c.l.b16 %v94
    %v532 = vunpack.c.h.b16 %v94
    %v533 = vunpack.c.l.b16 %v95
    %v534 = vunpack.c.h.b16 %v95
    %v535 = vunpack.c.l.b16 %v96
    %v536 = vunpack.c.h.b16 %v96
    %v537 = vunpack.c.l.b16 %v97
    %v538 = vunpack.c.h.b16 %v97
    %v539 = vunpack.c.l.b16 %v98
    %v540 = vunpack.c.h.b16 %v98
    %v541 = vunpack.c.l.b16 %v99
    %v542 = vunpack.c.h.b16 %v99
    %v543 = vunpack.c.l.b16 %v100
    %v544 = vunpack.c.h.b16 %v100
    %v545 = vunpack.c.l.b16 %v101
    %v546 = vunpack.c.h.b16 %v101
    %v547 = vunpack.c.l.b16 %v102
    %v548 = vunpack.c.h.b16 %v102
    %v549 = vunpack.c.l.b16 %v103
    %v550 = vunpack.c.h.b16 %v103
    %v551 = vunpack.c.l.b16 %v104
    %v552 = vunpack.c.h.b16 %v104
    %v553 = vunpack.c.l.b16 %v105
    %v554 = vunpack.c.h.b16 %v105
    %v555 = vunpack.c.l.b16 %v106
    %v556 = vunpack.c.h.b16 %v106
    %v557 = vunpack.c.l.b16 %v107
    %v558 = vunpack.c.h.b16 %v107
    %v559 = vunpack.c.l.b16 %v108
    %v560 = vunpack.c.h.b16 %v108
    %v561 = vunpack.c.l.b16 %v109
    %v562 = vunpack.c.h.b16 %v109
    %v563 = vunpack.c.l.b16 %v110
    %v564 = vunpack.c.h.b16 %v110
    %v565 = vunpack.c.l.b16 %v111
    %v566 = vunpack.c.h.b16 %v111
    %v567 = vunpack.c.l.b16 %v112
    %v568 = vunpack.c.h.b16 %v112
    %v569 = vunpack.c.l.b16 %v113
    %v570 = vunpack.c.h.b16 %v113
    %v571 = vunpack.c.l.b16 %v114
    %v572 = vunpack.c.h.b16 %v114
    %v573 = vunpack.c.l.b16 %v115
    %v574 = vunpack.c.h.b16 %v115
    %v575 = vunpack.c.l.b16 %v116
    %v576 = vunpack.c.h.b16 %v116
    %v577 = vunpack.c.l.b16 %v117
    %v578 = vunpack.c.h.b16 %v117
    %v579 = vunpack.c.l.b16 %v118
    %v580 = vunpack.c.h.b16 %v118
    %v581 = vunpack.c.l.b16 %v119
    %v582 = vunpack.c.h.b16 %v119
    %v583 = vunpack.c.l.b16 %v120
    %v584 = vunpack.c.h.b16 %v120
    %v585 = vunpack.c.l.b16 %v121
    %v586 = vunpack.c.h.b16 %v121
    %v587 = vunpack.c.l.b16 %v122
    %v588 = vunpack.c.h.b16 %v122
    %v589 = vunpack.c.l.b16 %v123
    %v590 = vunpack.c.h.b16 %v123
    %v591 = vunpack.c.l.b16 %v124
    %v592 = vunpack.c.h.b16 %v124
    %v593 = vunpack.c.l.b16 %v125
    %v594 = vunpack.c.h.b16 %v125
    %v595 = vunpack.c.l.b16 %v126
    %v596 = vunpack.c.h.b16 %v126
    %v597 = vunpack.c.l.b16 %v127
    %v598 = vunpack.c.h.b16 %v127
    %v599 = vunpack.c.l.b16 %v128
    %v600 = vunpack.c.h.b16 %v128
    %v601 = vunpack.c.l.b16 %v129
    %v602 = vunpack.c.h.b16 %v129
    %v603 = vunpack.c.l.b16 %v130
    %v604 = vunpack.c.h.b16 %v130
    %v605 = vunpack.c.l.b16 %v131
    %v606 = vunpack.c.h.b16 %v131
    %v607 = vunpack.c.l.b16 %v132
    %v608 = vunpack.c.h.b16 %v132
    %v609 = vunpack.c.l.b16 %v133
    %v610 = vunpack.c.h.b16 %v133
    %v611 = vunpack.c.l.b16 %v134
    %v612 = vunpack.c.h.b16 %v134
    %v613 = vunpack.c.l.b16 %v135
    %v614 = vunpack.c.h.b16 %v135
    %v615 = vunpack.c.l.b16 %v136
    %v616 = vunpack.c.h.b16 %v136
    %v617 = vunpack.c.l.b16 %v137
    %v618 = vunpack.c.h.b16 %v137
    %v619 = vunpack.c.l.b16 %v138
    %v620 = vunpack.c.h.b16 %v138
    %v621 = vunpack.c.l.b16 %v139
    %v622 = vunpack.c.h.b16 %v139
    %v623 = vunpack.c.l.b16 %v140
    %v624 = vunpack.c.h.b16 %v140
    %v625 = vunpack.c.l.b16 %v141
    %v626 = vunpack.c.h.b16 %v141
    %v627 = vunpack.c.l.b16 %v142
    %v628 = vunpack.c.h.b16 %v142
    %v629 = vunpack.c.l.b16 %v143
    %v630 = vunpack.c.h.b16 %v143
    %v631 = vunpack.c.l.b16 %v144
    %v632 = vunpack.c.h.b16 %v144
    %v633 = vunpack.c.l.b16 %v145
    %v634 = vunpack.c.h.b16 %v145
    %v635 = vunpack.c.l.b16 %v146
    %v636 = vunpack.c.h.b16 %v146
    %v637 = vunpack.c.l.b16 %v147
    %v638 = vunpack.c.h.b16 %v147
    %v639 = vunpack.c.l.b16 %v148
    %v640 = vunpack.c.h.b16 %v148
    %v641 = vunpack.c.l.b16 %v149
    %v642 = vunpack.c.h.b16 %v149
    %v643 = vunpack.c.l.b16 %v150
    %v644 = vunpack.c.h.b16 %v150
    %v645 = vunpack.c.l.b16 %v151
    %v646 = vunpack.c.h.b16 %v151
    %v647 = vunpack.c.l.b16 %v152
    %v648 = vunpack.c.h.b16 %v152
    %v649 = vunpack.c.l.b16 %v153
    %v650 = vunpack.c.h.b16 %v153
    %v651 = vunpack.c.l.b16 %v154
    %v652 = vunpack.c.h.b16 %v154
    %v653 = vunpack.c.l.b16 %v155
    %v654 = vunpack.c.h.b16 %v155
    %v655 = vunpack.c.l.b16 %v156
    %v656 = vunpack.c.h.b16 %v156
    %v657 = vunpack.c.l.b16 %v157
    %v658 = vunpack.c.h.b16 %v157
    %v659 = vunpack.c.l.b16 %v158
    %v660 = vunpack.c.h.b16 %v158
    %v661 = vunpack.c.l.b16 %v159
    %v662 = vunpack.c.h.b16 %v159
    %v663 = vunpack.c.l.b16 %v160
    %v664 = vunpack.c.h.b16 %v160
    %v665 = vunpack.c.l.b16 %v161
    %v666 = vunpack.c.h.b16 %v161
    %v667 = vunpack.c.l.b16 %v162
    %v668 = vunpack.c.h.b16 %v162
    %v669 = vunpack.c.l.b16 %v163
    %v670 = vunpack.c.h.b16 %v163
    %v671 = vunpack.c.l.b16 %v164
    %v672 = vunpack.c.h.b16 %v164
    %v673 = vunpack.c.l.b16 %v165
    %v674 = vunpack.c.h.b16 %v165
    %v675 = vunpack.c.l.b16 %v166
    %v676 = vunpack.c.h.b16 %v166
    %v677 = vunpack.c.l.b16 %v167
    %v678 = vunpack.c.h.b16 %v167
    %v679 = vunpack.c.l.b16 %v168
    %v680 = vunpack.c.h.b16 %v168
    %v681 = vunpack.c.l.b16 %v169
    %v682 = vunpack.c.h.b16 %v169
    %v683 = vunpack.c.l.b16 %v170
    %v684 = vunpack.c.h.b16 %v170
    %v685 = vunpack.c.l.b16 %v171
    %v686 = vunpack.c.h.b16 %v171
    %v687 = vunpack.c.l.b16 %v172
    %v688 = vunpack.c.h.b16 %v172
    %v689 = vunpack.c.l.b16 %v173
    %v690 = vunpack.c.h.b16 %v173
    %v691 = vunpack.c.l.b16 %v174
    %v692 = vunpack.c.h.b16 %v174
    %v693 = vunpack.c.l.b16 %v175
    %v694 = vunpack.c.h.b16 %v175
    %v695 = vunpack.c.l.b16 %v176
    %v696 = vunpack.c.h.b16 %v176
    %v697 = vunpack.c.l.b16 %v177
    %v698 = vunpack.c.h.b16 %v177
    %v699 = vunpack.c.l.b16 %v178
    %v700 = vunpack.c.h.b16 %v178
    %v701 = vunpack.c.l.b16 %v179
    %v702 = vunpack.c.h.b16 %v179
    %v703 = vunpack.c.l.b16 %v180
    %v704 = vunpack.c.h.b16 %v180
    %v705 = vunpack.c.l.b16 %v181
    %v706 = vunpack.c.h.b16 %v181
    %v707 = vunpack.c.l.b16 %v182
    %v708 = vunpack.c.h.b16 %v182
    %v709 = vunpack.c.l.b16 %v183
    %v710 = vunpack.c.h.b16 %v183
    %v711 = vunpack.c.l.b16 %v184
    %v712 = vunpack.c.h.b16 %v184
    %v713 = vunpack.c.l.b16 %v185
    %v714 = vunpack.c.h.b16 %v185
    %v715 = vunpack.c.l.b16 %v186
    %v716 = vunpack.c.h.b16 %v186
    %v717 = vunpack.c.l.b16 %v187
    %v718 = vunpack.c.h.b16 %v187
    %v719 = vunpack.c.l.b16 %v188
    %v720 = vunpack.c.h.b16 %v188
    %v721 = vunpack.c.l.b16 %v189
    %v722 = vunpack.c.h.b16 %v189
    %v723 = vunpack.c.l.b16 %v190
    %v724 = vunpack.c.h.b16 %v190
    %v725 = vunpack.c.l.b16 %v191
    %v726 = vunpack.c.h.b16 %v191
    %v727 = vunpack.c.l.b16 %v192
    %v728 = vunpack.c.h.b16 %v192
    %v729 = vunpack.c.l.b16 %v193
    %v730 = vunpack.c.h.b16 %v193
    %v731 = vunpack.c.l.b16 %v194
    %v732 = vunpack.c.h.b16 %v194
    %v733 = vunpack.c.l.b16 %v195
    %v734 = vunpack.c.h.b16 %v195
    %v735 = vunpack.c.l.b16 %v196
    %v736 = vunpack.c.h.b16 %v196
    %v737 = vunpack.c.l.b16 %v197
    %v738 = vunpack.c.h.b16 %v197
    %v739 = vunpack.c.l.b16 %v198
    %v740 = vunpack.c.h.b16 %v198
    %v741 = vunpack.c.l.b16 %v199
    %v742 = vunpack.c.h.b16 %v199
    %v743 = vunpack.c.l.b16 %v200
    %v744 = vunpack.c.h.b16 %v200
    %v745 = vunpack.c.l.b16 %v201
    %v746 = vunpack.c.h.b16 %v201
    %v747 = vunpack.c.l.b16 %v202
    %v748 = vunpack.c.h.b16 %v202
    %v749 = vunpack.c.l.b16 %v203
    %v750 = vunpack.c.h.b16 %v203
    %v751 = vunpack.c.l.b16 %v204
    %v752 = vunpack.c.h.b16 %v204
    %v753 = vunpack.c.l.b16 %v205
    %v754 = vunpack.c.h.b16 %v205
    %v755 = vunpack.c.l.b16 %v206
    %v756 = vunpack.c.h.b16 %v206
    %v757 = vunpack.c.l.b16 %v207
    %v758 = vunpack.c.h.b16 %v207
    %v759 = vunpack.c.l.b16 %v208
    %v760 = vunpack.c.h.b16 %v208
    %v761 = vunpack.c.l.b16 %v209
    %v762 = vunpack.c.h.b16 %v209
    %v763 = vunpack.c.l.b16 %v210
    %v764 = vunpack.c.h.b16 %v210
    %v765 = vunpack.c.l.b16 %v211
    %v766 = vunpack.c.h.b16 %v211
    %v767 = vunpack.c.l.b16 %v212
    %v768 = vunpack.c.h.b16 %v212
    %v769 = vunpack.c.l.b16 %v213
    %v770 = vunpack.c.h.b16 %v213
    %v771 = vunpack.c.l.b16 %v214
    %v772 = vunpack.c.h.b16 %v214
    %v773 = vunpack.c.l.b16 %v215
    %v774 = vunpack.c.h.b16 %v215
    %v775 = vunpack.c.l.b16 %v216
    %v776 = vunpack.c.h.b16 %v216
    %v777 = vunpack.c.l.b16 %v217
    %v778 = vunpack.c.h.b16 %v217
    %v779 = vunpack.c.l.b16 %v218
    %v780 = vunpack.c.h.b16 %v218
    %v781 = vunpack.c.l.b16 %v219
    %v782 = vunpack.c.h.b16 %v219
    %v783 = vunpack.c.l.b16 %v220
    %v784 = vunpack.c.h.b16 %v220
    %v785 = vunpack.c.l.b16 %v221
    %v786 = vunpack.c.h.b16 %v221
    %v787 = vunpack.c.l.b16 %v222
    %v788 = vunpack.c.h.b16 %v222
    %v789 = vunpack.c.l.b16 %v223
    %v790 = vunpack.c.h.b16 %v223
    %v791 = vunpack.c.l.b16 %v224
    %v792 = vunpack.c.h.b16 %v224
    %v793 = vunpack.c.l.b16 %v225
    %v794 = vunpack.c.h.b16 %v225
    %v795 = vunpack.c.l.b16 %v226
    %v796 = vunpack.c.h.b16 %v226
    %v797 = vunpack.c.l.b16 %v227
    %v798 = vunpack.c.h.b16 %v227
    %v799 = vunpack.c.l.b16 %v228
    %v800 = vunpack.c.h.b16 %v228
    %v801 = vunpack.c.l.b16 %v229
    %v802 = vunpack.c.h.b16 %v229
    %v803 = vunpack.c.l.b16 %v230
    %v804 = vunpack.c.h.b16 %v230
    %v805 = vunpack.c.l.b16 %v231
    %v806 = vunpack.c.h.b16 %v231
    %v807 = vunpack.c.l.b16 %v232
    %v808 = vunpack.c.h.b16 %v232
    %v809 = vunpack.c.l.b16 %v233
    %v810 = vunpack.c.h.b16 %v233
    %v811 = vunpack.c.l.b16 %v234
    %v812 = vunpack.c.h.b16 %v234
    %v813 = vunpack.c.l.b16 %v235
    %v814 = vunpack.c.h.b16 %v235
    %v815 = vunpack.c.l.b16 %v236
    %v816 = vunpack.c.h.b16 %v236
    %v817 = vunpack.c.l.b16 %v237
    %v818 = vunpack.c.h.b16 %v237
    %v819 = vunpack.c.l.b16 %v238
    %v820 = vunpack.c.h.b16 %v238
    %v821 = vunpack.c.l.b16 %v239
    %v822 = vunpack.c.h.b16 %v239
    %v823 = vunpack.c.l.b16 %v240
    %v824 = vunpack.c.h.b16 %v240
    %v825 = vunpack.c.l.b16 %v241
    %v826 = vunpack.c.h.b16 %v241
    %v827 = vunpack.c.l.b16 %v242
    %v828 = vunpack.c.h.b16 %v242
    %v829 = vunpack.c.l.b16 %v243
    %v830 = vunpack.c.h.b16 %v243
    %v831 = vunpack.c.l.b16 %v244
    %v832 = vunpack.c.h.b16 %v244
    %v833 = vunpack.c.l.b16 %v245
    %v834 = vunpack.c.h.b16 %v245
    %v835 = vunpack.c.l.b16 %v246
    %v836 = vunpack.c.h.b16 %v246
    %v837 = vunpack.c.l.b16 %v247
    %v838 = vunpack.c.h.b16 %v247
    %v839 = vunpack.c.l.b16 %v248
    %v840 = vunpack.c.h.b16 %v248
    %v841 = vunpack.c.l.b16 %v249
    %v842 = vunpack.c.h.b16 %v249
    %v843 = vunpack.c.l.b16 %v250
    %v844 = vunpack.c.h.b16 %v250
    %v845 = vunpack.c.l.b16 %v251
    %v846 = vunpack.c.h.b16 %v251
    %v847 = vunpack.c.l.b16 %v252
    %v848 = vunpack.c.h.b16 %v252
    %v849 = vunpack.c.l.b16 %v253
    %v850 = vunpack.c.h.b16 %v253
    %v851 = vunpack.c.l.b16 %v254
    %v852 = vunpack.c.h.b16 %v254
    %v853 = vunpack.c.l.b16 %v255
    %v854 = vunpack.c.h.b16 %v255
    %v855 = vunpack.c.l.b16 %v256
    %v856 = vunpack.c.h.b16 %v256
    %v857 = vunpack.c.l.b16 %v257
    %v858 = vunpack.c.h.b16 %v257
    %v859 = vunpack.c.l.b16 %v258
    %v860 = vunpack.c.h.b16 %v258
    %v861 = vunpack.c.l.b16 %v259
    %v862 = vunpack.c.h.b16 %v259
    %v863 = vunpack.c.l.b16 %v260
    %v864 = vunpack.c.h.b16 %v260
    %v865 = vunpack.c.l.b16 %v261
    %v866 = vunpack.c.h.b16 %v261
    %v867 = vunpack.c.l.b16 %v262
    %v868 = vunpack.c.h.b16 %v262
    %v869 = vunpack.c.l.b16 %v263
    %v870 = vunpack.c.h.b16 %v263
    %v871 = vunpack.c.l.b16 %v264
    %v872 = vunpack.c.h.b16 %v264
    %v873 = vunpack.c.l.b16 %v265
    %v874 = vunpack.c.h.b16 %v265
    %v875 = vunpack.c.l.b16 %v266
    %v876 = vunpack.c.h.b16 %v266
    %v877 = vpack.c.b16 %v489, %v485
    %v878 = vpack.c.b16 %v490, %v486
    %v879 = vpack.c.b16 %v491, %v487
    %v880 = vpack.c.b16 %v492, %v488
    %v881 = vpack.c.b16 %v497, %v493
    %v882 = vpack.c.b16 %v498, %v494
    %v883 = vpack.c.b16 %v499, %v495
    %v884 = vpack.c.b16 %v500, %v496
    %v885 = vpack.c.b16 %v505, %v501
    %v886 = vpack.c.b16 %v506, %v502
    %v887 = vpack.c.b16 %v507, %v503
    %v888 = vpack.c.b16 %v508, %v504
    %v889 = vpack.c.b16 %v513, %v509
    %v890 = vpack.c.b16 %v514, %v510
    %v891 = vpack.c.b16 %v515, %v511
    %v892 = vpack.c.b16 %v516, %v512
    %v893 = vpack.c.b16 %v521, %v517
    %v894 = vpack.c.b16 %v522, %v518
    %v895 = vpack.c.b16 %v523, %v519
    %v896 = vpack.c.b16 %v524, %v520
    %v897 = vpack.c.b16 %v529, %v525
    %v898 = vpack.c.b16 %v530, %v526
    %v899 = vpack.c.b16 %v531, %v527
    %v900 = vpack.c.b16 %v532, %v528
    %v901 = vpack.c.b16 %v537, %v533
    %v902 = vpack.c.b16 %v538, %v534
    %v903 = vpack.c.b16 %v539, %v535
    %v904 = vpack.c.b16 %v540, %v536
    %v905 = vpack.c.b16 %v545, %v541
    %v906 = vpack.c.b16 %v546, %v542
    %v907 = vpack.c.b16 %v547, %v543
    %v908 = vpack.c.b16 %v548, %v544
    %v909 = vpack.c.b16 %v553, %v549
    %v910 = vpack.c.b16 %v554, %v550
    %v911 = vpack.c.b16 %v555, %v551
    %v912 = vpack.c.b16 %v556, %v552
    %v913 = vpack.c.b16 %v561, %v557
    %v914 = vpack.c.b16 %v562, %v558
    %v915 = vpack.c.b16 %v563, %v559
    %v916 = vpack.c.b16 %v564, %v560
    %v917 = vpack.c.b16 %v569, %v565
    %v918 = vpack.c.b16 %v570, %v566
    %v919 = vpack.c.b16 %v571, %v567
    %v920 = vpack.c.b16 %v572, %v568
    %v921 = vpack.c.b16 %v577, %v573
    %v922 = vpack.c.b16 %v578, %v574
    %v923 = vpack.c.b16 %v579, %v575
    %v924 = vpack.c.b16 %v580, %v576
    %v925 = vpack.c.b16 %v585, %v581
    %v926 = vpack.c.b16 %v586, %v582
    %v927 = vpack.c.b16 %v587, %v583
    %v928 = vpack.c.b16 %v588, %v584
    %v929 = vpack.c.b16 %v593, %v589
    %v930 = vpack.c.b16 %v594, %v590
    %v931 = vpack.c.b16 %v595, %v591
    %v932 = vpack.c.b16 %v596, %v592
    %v933 = vpack.c.b16 %v601, %v597
    %v934 = vpack.c.b16 %v602, %v598
    %v935 = vpack.c.b16 %v603, %v599
    %v936 = vpack.c.b16 %v604, %v600
    %v937 = vpack.c.b16 %v609, %v605
    %v938 = vpack.c.b16 %v610, %v606
    %v939 = vpack.c.b16 %v611, %v607
    %v940 = vpack.c.b16 %v612, %v608
    %v941 = vpack.c.b16 %v617, %v613
    %v942 = vpack.c.b16 %v618, %v614
    %v943 = vpack.c.b16 %v619, %v615
    %v944 = vpack.c.b16 %v620, %v616
    %v945 = vpack.c.b16 %v625, %v621
    %v946 = vpack.c.b16 %v626, %v622
    %v947 = vpack.c.b16 %v627, %v623
    %v948 = vpack.c.b16 %v628, %v624
    %v949 = vpack.c.b16 %v633, %v629
    %v950 = vpack.c.b16 %v634, %v630
    %v951 = vpack.c.b16 %v635, %v631
    %v952 = vpack.c.b16 %v636, %v632
    %v953 = vpack.c.b16 %v641, %v637
    %v954 = vpack.c.b16 %v642, %v638
    %v955 = vpack.c.b16 %v643, %v639
    %v956 = vpack.c.b16 %v644, %v640
    %v957 = vpack.c.b16 %v649, %v645
    %v958 = vpack.c.b16 %v650, %v646
    %v959 = vpack.c.b16 %v651, %v647
    %v960 = vpack.c.b16 %v652, %v648
    %v961 = vpack.c.b16 %v657, %v653
    %v962 = vpack.c.b16 %v658, %v654
    %v963 = vpack.c.b16 %v659, %v655
    %v964 = vpack.c.b16 %v660, %v656
    %v965 = vpack.c.b16 %v665, %v661
    %v966 = vpack.c.b16 %v666, %v662
    %v967 = vpack.c.b16 %v667, %v663
    %v968 = vpack.c.b16 %v668, %v664
    %v969 = vpack.c.b16 %v673, %v669
    %v970 = vpack.c.b16 %v674, %v670
    %v971 = vpack.c.b16 %v675, %v671
    %v972 = vpack.c.b16 %v676, %v672
    %v973 = vpack.c.b16 %v681, %v677
    %v974 = vpack.c.b16 %v682, %v678
    %v975 = vpack.c.b16 %v683, %v679
    %v976 = vpack.c.b16 %v684, %v680
    %v977 = vpack.c.b16 %v689, %v685
    %v978 = vpack.c.b16 %v690, %v686
    %v979 = vpack.c.b16 %v691, %v687
    %v980 = vpack.c.b16 %v692, %v688
    %v981 = vpack.c.b16 %v697, %v693
    %v982 = vpack.c.b16 %v698, %v694
    %v983 = vpack.c.b16 %v699, %v695
    %v984 = vpack.c.b16 %v700, %v696
    %v985 = vpack.c.b16 %v705, %v701
    %v986 = vpack.c.b16 %v706, %v702
    %v987 = vpack.c.b16 %v707, %v703
    %v988 = vpack.c.b16 %v708, %v704
    %v989 = vpack.c.b16 %v713, %v709
    %v990 = vpack.c.b16 %v714, %v710
    %v991 = vpack.c.b16 %v715, %v711
    %v992 = vpack.c.b16 %v716, %v712
    %v993 = vpack.c.b16 %v721, %v717
    %v994 = vpack.c.b16 %v722, %v718
    %v995 = vpack.c.b16 %v723, %v719
    %v996 = vpack.c.b16 %v724, %v720
    %v997 = vpack.c.b16 %v729, %v725
    %v998 = vpack.c.b16 %v730, %v726
    %v999 = vpack.c.b16 %v731, %v727
    %v1000 = vpack.c.b16 %v732, %v728
    %v1001 = vpack.c.b16 %v737, %v733
    %v1002 = vpack.c.b16 %v738, %v734
    %v1003 = vpack.c.b16 %v739, %v735
    %v1004 = vpack.c.b16 %v740, %v736
    %v1005 = vpack.c.b16 %v745, %v741
    %v1006 = vpack.c.b16 %v746, %v742
    %v1007 = vpack.c.b16 %v747, %v743
    %v1008 = vpack.c.b16 %v748, %v744
    %v1009 = vpack.c.b16 %v753, %v749
    %v1010 = vpack.c.b16 %v754, %v750
    %v1011 = vpack.c.b16 %v755, %v751
    %v1012 = vpack.c.b16 %v756, %v752
    %v1013 = vpack.c.b16 %v761, %v757
    %v1014 = vpack.c.b16 %v762, %v758
    %v1015 = vpack.c.b16 %v763, %v759
    %v1016 = vpack.c.b16 %v764, %v760
    %v1017 = vpack.c.b16 %v769, %v765
    %v1018 = vpack.c.b16 %v770, %v766
    %v1019 = vpack.c.b16 %v771, %v767
    %v1020 = vpack.c.b16 %v772, %v768
    %v1021 = vpack.c.b16 %v777, %v773
    %v1022 = vpack.c.b16 %v778, %v774
    %v1023 = vpack.c.b16 %v779, %v775
    %v1024 = vpack.c.b16 %v780, %v776
    %v1025 = vpack.c.b16 %v785, %v781
    %v1026 = vpack.c.b16 %v786, %v782
    %v1027 = vpack.c.b16 %v787, %v783
    %v1028 = vpack.c.b16 %v788, %v784
    %v1029 = vpack.c.b16 %v793, %v789
    %v1030 = vpack.c.b16 %v794, %v790
    %v1031 = vpack.c.b16 %v795, %v791
    %v1032 = vpack.c.b16 %v796, %v792
    %v1033 = vpack.c.b16 %v801, %v797
    %v1034 = vpack.c.b16 %v802, %v798
    %v1035 = vpack.c.b16 %v803, %v799
    %v1036 = vpack.c.b16 %v804, %v800
    %v1037 = vpack.c.b16 %v809, %v805
    %v1038 = vpack.c.b16 %v810, %v806
    %v1039 = vpack.c.b16 %v811, %v807
    %v1040 = vpack.c.b16 %v812, %v808
    %v1041 = vpack.c.b16 %v817, %v813
    %v1042 = vpack.c.b16 %v818, %v814
    %v1043 = vpack.c.b16 %v819, %v815
    %v1044 = vpack.c.b16 %v820, %v816
    %v1045 = vpack.c.b16 %v825, %v821
    %v1046 = vpack.c.b16 %v826, %v822
    %v1047 = vpack.c.b16 %v827, %v823
    %v1048 = vpack.c.b16 %v828, %v824
    %v1049 = vpack.c.b16 %v833, %v829
    %v1050 = vpack.c.b16 %v834, %v830
    %v1051 = vpack.c.b16 %v835, %v831
    %v1052 = vpack.c.b16 %v836, %v832
    %v1053 = vpack.c.b16 %v841, %v837
    %v1054 = vpack.c.b16 %v842, %v838
    %v1055 = vpack.c.b16 %v843, %v839
    %v1056 = vpack.c.b16 %v844, %v840
    %v1057 = vpack.c.b16 %v849, %v845
    %v1058 = vpack.c.b16 %v850, %v846
    %v1059 = vpack.c.b16 %v851, %v847
    %v1060 = vpack.c.b16 %v852, %v848
    %v1061 = vpack.c.b16 %v857, %v853
    %v1062 = vpack.c.b16 %v858, %v854
    %v1063 = vpack.c.b16 %v859, %v855
    %v1064 = vpack.c.b16 %v860, %v856
    %v1065 = vpack.c.b16 %v865, %v861
    %v1066 = vpack.c.b16 %v866, %v862
    %v1067 = vpack.c.b16 %v867, %v863
    %v1068 = vpack.c.b16 %v868, %v864
    %v1069 = vpack.c.b16 %v873, %v869
    %v1070 = vpack.c.b16 %v874, %v870
    %v1071 = vpack.c.b16 %v875, %v871
    %v1072 = vpack.c.b16 %v876, %v872
    %vm1269 = vcmask 130048
    %v1271 = vsel %vm1269, %v70, 0
    %1273 = vmatprep.subr.bf16.mxu0 %v906
    %1274 = vmatpush1.bf16.msra.mxu0 %v905
    %1275 = vmatprep.subr.bf16.mxu0 %v902
    %1276 = vmatpush1.bf16.msra.mxu0 %v901
    %1277 = vmatprep.subr.bf16.mxu0 %v898
    %1278 = vmatpush1.bf16.msra.mxu0 %v897
    %1279 = vmatprep.subr.bf16.mxu0 %v894
    %1280 = vmatpush1.bf16.msra.mxu0 %v893
    %1281 = vmatprep.subr.bf16.mxu0 %v890
    %1282 = vmatpush1.bf16.msra.mxu0 %v889
    %1283 = vmatprep.subr.bf16.mxu0 %v886
    %1284 = vmatpush1.bf16.msra.mxu0 %v885
    %1285 = vmatprep.subr.bf16.mxu0 %v882
    %1286 = vmatpush1.bf16.msra.mxu0 %v881
    %1287 = vmatprep.subr.bf16.mxu0 %v878
    %1288 = vmatpush1.bf16.msra.mxu0 %v877
    %1289 = vmatprep.subr.bf16.mxu0 %v938
    %1290 = vmatpush2.bf16.msra.mxu0 %v937
    %1291 = vmatprep.subr.bf16.mxu0 %v934
    %1292 = vmatpush2.bf16.msra.mxu0 %v933
    %1293 = vmatprep.subr.bf16.mxu0 %v930
    %1294 = vmatpush2.bf16.msra.mxu0 %v929
    %1295 = vmatprep.subr.bf16.mxu0 %v926
    %1296 = vmatpush2.bf16.msra.mxu0 %v925
    %1297 = vmatprep.subr.bf16.mxu0 %v922
    %1298 = vmatpush2.bf16.msra.mxu0 %v921
    %1299 = vmatprep.subr.bf16.mxu0 %v918
    %1300 = vmatpush2.bf16.msra.mxu0 %v917
    %1301 = vmatprep.subr.bf16.mxu0 %v914
    %1302 = vmatpush2.bf16.msra.mxu0 %v913
    %1303 = vmatprep.subr.bf16.mxu0 %v910
    %1304 = vmatpush2.bf16.msra.mxu0 %v909
    %1305 = vmatprep.mubr.bf16.mxu0 %v65
    %1306 = vmatmul.mubr.bf16.gmra.mxu0 %v64
    %v1307 = vpop.f32.mrf.mxu0
    %v1308 = vadd.f32 %v272, %v1307
    %v1309 = vpop.f32.mrf.mxu0
    %v1310 = vadd.f32 %v276, %v1309
    %v1311 = vpop.f32.mrf.mxu0
    %v1312 = vpop.f32.mrf.mxu0
    %1313 = vdwg.mxu0
    %1314 = vmatprep.subr.bf16.mxu0 %v970
    %1315 = vmatpush1.bf16.msra.mxu0 %v969
    %1316 = vmatprep.subr.bf16.mxu0 %v966
    %1317 = vmatpush1.bf16.msra.mxu0 %v965
    %1318 = vmatprep.subr.bf16.mxu0 %v962
    %1319 = vmatpush1.bf16.msra.mxu0 %v961
    %1320 = vmatprep.subr.bf16.mxu0 %v958
    %1321 = vmatpush1.bf16.msra.mxu0 %v957
    %1322 = vmatprep.subr.bf16.mxu0 %v954
    %1323 = vmatpush1.bf16.msra.mxu0 %v953
    %1324 = vmatprep.subr.bf16.mxu0 %v950
    %1325 = vmatpush1.bf16.msra.mxu0 %v949
    %1326 = vmatprep.subr.bf16.mxu0 %v946
    %1327 = vmatpush1.bf16.msra.mxu0 %v945
    %1328 = vmatprep.subr.bf16.mxu0 %v942
    %1329 = vmatpush1.bf16.msra.mxu0 %v941
    %1330 = vmatprep.subr.bf16.mxu0 %v1002
    %1331 = vmatpush2.bf16.msra.mxu0 %v1001
    %1332 = vmatprep.subr.bf16.mxu0 %v998
    %1333 = vmatpush2.bf16.msra.mxu0 %v997
    %1334 = vmatprep.subr.bf16.mxu0 %v994
    %1335 = vmatpush2.bf16.msra.mxu0 %v993
    %1336 = vmatprep.subr.bf16.mxu0 %v990
    %1337 = vmatpush2.bf16.msra.mxu0 %v989
    %1338 = vmatprep.subr.bf16.mxu0 %v986
    %1339 = vmatpush2.bf16.msra.mxu0 %v985
    %1340 = vmatprep.subr.bf16.mxu0 %v982
    %1341 = vmatpush2.bf16.msra.mxu0 %v981
    %1342 = vmatprep.subr.bf16.mxu0 %v978
    %1343 = vmatpush2.bf16.msra.mxu0 %v977
    %1344 = vmatprep.subr.bf16.mxu0 %v974
    %1345 = vmatpush2.bf16.msra.mxu0 %v973
    %1346 = vmatprep.mubr.bf16.mxu0 %v67
    %1347 = vmatmul.mubr.bf16.gmra.mxu0 %v66
    %v1348 = vpop.f32.mrf.mxu0
    %v1349 = vadd.f32 %v1308, %v1348
    %v1350 = vpop.f32.mrf.mxu0
    %v1351 = vadd.f32 %v1310, %v1350
    %v1352 = vpop.f32.mrf.mxu0
    %v1353 = vpop.f32.mrf.mxu0
    %1354 = vdwg.mxu0
    %1355 = vmatprep.subr.bf16.mxu0 %v1034
    %1356 = vmatpush1.bf16.msra.mxu0 %v1033
    %1357 = vmatprep.subr.bf16.mxu0 %v1030
    %1358 = vmatpush1.bf16.msra.mxu0 %v1029
    %1359 = vmatprep.subr.bf16.mxu0 %v1026
    %1360 = vmatpush1.bf16.msra.mxu0 %v1025
    %1361 = vmatprep.subr.bf16.mxu0 %v1022
    %1362 = vmatpush1.bf16.msra.mxu0 %v1021
    %1363 = vmatprep.subr.bf16.mxu0 %v1018
    %1364 = vmatpush1.bf16.msra.mxu0 %v1017
    %1365 = vmatprep.subr.bf16.mxu0 %v1014
    %1366 = vmatpush1.bf16.msra.mxu0 %v1013
    %1367 = vmatprep.subr.bf16.mxu0 %v1010
    %1368 = vmatpush1.bf16.msra.mxu0 %v1009
    %1369 = vmatprep.subr.bf16.mxu0 %v1006
    %1370 = vmatpush1.bf16.msra.mxu0 %v1005
    %1371 = vmatprep.subr.bf16.mxu0 %v1066
    %1372 = vmatpush2.bf16.msra.mxu0 %v1065
    %1373 = vmatprep.subr.bf16.mxu0 %v1062
    %1374 = vmatpush2.bf16.msra.mxu0 %v1061
    %1375 = vmatprep.subr.bf16.mxu0 %v1058
    %1376 = vmatpush2.bf16.msra.mxu0 %v1057
    %1377 = vmatprep.subr.bf16.mxu0 %v1054
    %1378 = vmatpush2.bf16.msra.mxu0 %v1053
    %1379 = vmatprep.subr.bf16.mxu0 %v1050
    %1380 = vmatpush2.bf16.msra.mxu0 %v1049
    %1381 = vmatprep.subr.bf16.mxu0 %v1046
    %1382 = vmatpush2.bf16.msra.mxu0 %v1045
    %1383 = vmatprep.subr.bf16.mxu0 %v1042
    %1384 = vmatpush2.bf16.msra.mxu0 %v1041
    %1385 = vmatprep.subr.bf16.mxu0 %v1038
    %1386 = vmatpush2.bf16.msra.mxu0 %v1037
    %1387 = vmatprep.mubr.bf16.mxu0 %v69
    %1388 = vmatmul.mubr.bf16.gmra.mxu0 %v68
    %v1389 = vpop.f32.mrf.mxu0
    %v1390 = vadd.f32 %v1349, %v1389
    %v1391 = vpop.f32.mrf.mxu0
    %v1392 = vadd.f32 %v1351, %v1391
    %v1393 = vpop.f32.mrf.mxu0
    %v1394 = vpop.f32.mrf.mxu0
    %1395 = vdwg.mxu0
    %1396 = vmatprep.subr.bf16.mxu0 0
    %1397 = vmatpush1.bf16.msra.mxu0 0
    %1398 = vmatprep.subr.bf16.mxu0 0
    %1399 = vmatpush1.bf16.msra.mxu0 0
    %1400 = vmatprep.subr.bf16.mxu0 0
    %1401 = vmatpush1.bf16.msra.mxu0 0
    %1402 = vmatprep.subr.bf16.mxu0 0
    %1403 = vmatpush1.bf16.msra.mxu0 0
    %1404 = vmatprep.subr.bf16.mxu0 0
    %1405 = vmatpush1.bf16.msra.mxu0 0
    %1406 = vmatprep.subr.bf16.mxu0 0
    %1407 = vmatpush1.bf16.msra.mxu0 0
    %1408 = vmatprep.subr.bf16.mxu0 0
    %1409 = vmatpush1.bf16.msra.mxu0 0
    %1410 = vmatprep.subr.bf16.mxu0 %v1070
    %1411 = vmatpush1.bf16.msra.mxu0 %v1069
    %1412 = vmatprep.subr.bf16.mxu0 0
    %1413 = vmatpush2.bf16.msra.mxu0 0
    %1414 = vmatprep.subr.bf16.mxu0 0
    %1415 = vmatpush2.bf16.msra.mxu0 0
    %1416 = vmatprep.subr.bf16.mxu0 0
    %1417 = vmatpush2.bf16.msra.mxu0 0
    %1418 = vmatprep.subr.bf16.mxu0 0
    %1419 = vmatpush2.bf16.msra.mxu0 0
    %1420 = vmatprep.subr.bf16.mxu0 0
    %1421 = vmatpush2.bf16.msra.mxu0 0
    %1422 = vmatprep.subr.bf16.mxu0 0
    %1423 = vmatpush2.bf16.msra.mxu0 0
    %1424 = vmatprep.subr.bf16.mxu0 0
    %1425 = vmatpush2.bf16.msra.mxu0 0
    %1426 = vmatprep.subr.bf16.mxu0 0
    %1427 = vmatpush2.bf16.msra.mxu0 0
    %1428 = vmatprep.mubr.bf16.mxu0 0
    %1429 = vmatmul.mubr.bf16.gmra.mxu0 %v1271
    %v1430 = vpop.f32.mrf.mxu0
    %v1431 = vadd.f32 %v1390, %v1430
    %v1432 = vpop.f32.mrf.mxu0
    %v1433 = vadd.f32 %v1392, %v1432
    %v1434 = vpop.f32.mrf.mxu0
    %v1435 = vpop.f32.mrf.mxu0
    %1436 = vdwg.mxu0
    %1437 = vmatprep.subr.bf16.mxu0 %v908
    %1438 = vmatpush1.bf16.msra.mxu0 %v907
    %1439 = vmatprep.subr.bf16.mxu0 %v904
    %1440 = vmatpush1.bf16.msra.mxu0 %v903
    %1441 = vmatprep.subr.bf16.mxu0 %v900
    %1442 = vmatpush1.bf16.msra.mxu0 %v899
    %1443 = vmatprep.subr.bf16.mxu0 %v896
    %1444 = vmatpush1.bf16.msra.mxu0 %v895
    %1445 = vmatprep.subr.bf16.mxu0 %v892
    %1446 = vmatpush1.bf16.msra.mxu0 %v891
    %1447 = vmatprep.subr.bf16.mxu0 %v888
    %1448 = vmatpush1.bf16.msra.mxu0 %v887
    %1449 = vmatprep.subr.bf16.mxu0 %v884
    %1450 = vmatpush1.bf16.msra.mxu0 %v883
    %1451 = vmatprep.subr.bf16.mxu0 %v880
    %1452 = vmatpush1.bf16.msra.mxu0 %v879
    %1453 = vmatprep.subr.bf16.mxu0 %v940
    %1454 = vmatpush2.bf16.msra.mxu0 %v939
    %1455 = vmatprep.subr.bf16.mxu0 %v936
    %1456 = vmatpush2.bf16.msra.mxu0 %v935
    %1457 = vmatprep.subr.bf16.mxu0 %v932
    %1458 = vmatpush2.bf16.msra.mxu0 %v931
    %1459 = vmatprep.subr.bf16.mxu0 %v928
    %1460 = vmatpush2.bf16.msra.mxu0 %v927
    %1461 = vmatprep.subr.bf16.mxu0 %v924
    %1462 = vmatpush2.bf16.msra.mxu0 %v923
    %1463 = vmatprep.subr.bf16.mxu0 %v920
    %1464 = vmatpush2.bf16.msra.mxu0 %v919
    %1465 = vmatprep.subr.bf16.mxu0 %v916
    %1466 = vmatpush2.bf16.msra.mxu0 %v915
    %1467 = vmatprep.subr.bf16.mxu0 %v912
    %1468 = vmatpush2.bf16.msra.mxu0 %v911
    %1469 = vmatprep.mubr.bf16.mxu0 %v65
    %1470 = vmatmul.mubr.bf16.gmra.mxu0 %v64
    %v1471 = vpop.f32.mrf.mxu0
    %v1472 = vadd.f32 %v280, %v1471
    %v1473 = vpop.f32.mrf.mxu0
    %v1474 = vadd.f32 %v284, %v1473
    %v1475 = vpop.f32.mrf.mxu0
    %v1476 = vpop.f32.mrf.mxu0
    %1477 = vdwg.mxu0
    %1478 = vmatprep.subr.bf16.mxu0 %v972
    %1479 = vmatpush1.bf16.msra.mxu0 %v971
    %1480 = vmatprep.subr.bf16.mxu0 %v968
    %1481 = vmatpush1.bf16.msra.mxu0 %v967
    %1482 = vmatprep.subr.bf16.mxu0 %v964
    %1483 = vmatpush1.bf16.msra.mxu0 %v963
    %1484 = vmatprep.subr.bf16.mxu0 %v960
    %1485 = vmatpush1.bf16.msra.mxu0 %v959
    %1486 = vmatprep.subr.bf16.mxu0 %v956
    %1487 = vmatpush1.bf16.msra.mxu0 %v955
    %1488 = vmatprep.subr.bf16.mxu0 %v952
    %1489 = vmatpush1.bf16.msra.mxu0 %v951
    %1490 = vmatprep.subr.bf16.mxu0 %v948
    %1491 = vmatpush1.bf16.msra.mxu0 %v947
    %1492 = vmatprep.subr.bf16.mxu0 %v944
    %1493 = vmatpush1.bf16.msra.mxu0 %v943
    %1494 = vmatprep.subr.bf16.mxu0 %v1004
    %1495 = vmatpush2.bf16.msra.mxu0 %v1003
    %1496 = vmatprep.subr.bf16.mxu0 %v1000
    %1497 = vmatpush2.bf16.msra.mxu0 %v999
    %1498 = vmatprep.subr.bf16.mxu0 %v996
    %1499 = vmatpush2.bf16.msra.mxu0 %v995
    %1500 = vmatprep.subr.bf16.mxu0 %v992
    %1501 = vmatpush2.bf16.msra.mxu0 %v991
    %1502 = vmatprep.subr.bf16.mxu0 %v988
    %1503 = vmatpush2.bf16.msra.mxu0 %v987
    %1504 = vmatprep.subr.bf16.mxu0 %v984
    %1505 = vmatpush2.bf16.msra.mxu0 %v983
    %1506 = vmatprep.subr.bf16.mxu0 %v980
    %1507 = vmatpush2.bf16.msra.mxu0 %v979
    %1508 = vmatprep.subr.bf16.mxu0 %v976
    %1509 = vmatpush2.bf16.msra.mxu0 %v975
    %1510 = vmatprep.mubr.bf16.mxu0 %v67
    %1511 = vmatmul.mubr.bf16.gmra.mxu0 %v66
    %v1512 = vpop.f32.mrf.mxu0
    %v1513 = vadd.f32 %v1472, %v1512
    %v1514 = vpop.f32.mrf.mxu0
    %v1515 = vadd.f32 %v1474, %v1514
    %v1516 = vpop.f32.mrf.mxu0
    %v1517 = vpop.f32.mrf.mxu0
    %1518 = vdwg.mxu0
    %1519 = vmatprep.subr.bf16.mxu0 %v1036
    %1520 = vmatpush1.bf16.msra.mxu0 %v1035
    %1521 = vmatprep.subr.bf16.mxu0 %v1032
    %1522 = vmatpush1.bf16.msra.mxu0 %v1031
    %1523 = vmatprep.subr.bf16.mxu0 %v1028
    %1524 = vmatpush1.bf16.msra.mxu0 %v1027
    %1525 = vmatprep.subr.bf16.mxu0 %v1024
    %1526 = vmatpush1.bf16.msra.mxu0 %v1023
    %1527 = vmatprep.subr.bf16.mxu0 %v1020
    %1528 = vmatpush1.bf16.msra.mxu0 %v1019
    %1529 = vmatprep.subr.bf16.mxu0 %v1016
    %1530 = vmatpush1.bf16.msra.mxu0 %v1015
    %1531 = vmatprep.subr.bf16.mxu0 %v1012
    %1532 = vmatpush1.bf16.msra.mxu0 %v1011
    %1533 = vmatprep.subr.bf16.mxu0 %v1008
    %1534 = vmatpush1.bf16.msra.mxu0 %v1007
    %1535 = vmatprep.subr.bf16.mxu0 %v1068
    %1536 = vmatpush2.bf16.msra.mxu0 %v1067
    %1537 = vmatprep.subr.bf16.mxu0 %v1064
    %1538 = vmatpush2.bf16.msra.mxu0 %v1063
    %1539 = vmatprep.subr.bf16.mxu0 %v1060
    %1540 = vmatpush2.bf16.msra.mxu0 %v1059
    %1541 = vmatprep.subr.bf16.mxu0 %v1056
    %1542 = vmatpush2.bf16.msra.mxu0 %v1055
    %1543 = vmatprep.subr.bf16.mxu0 %v1052
    %1544 = vmatpush2.bf16.msra.mxu0 %v1051
    %1545 = vmatprep.subr.bf16.mxu0 %v1048
    %1546 = vmatpush2.bf16.msra.mxu0 %v1047
    %1547 = vmatprep.subr.bf16.mxu0 %v1044
    %1548 = vmatpush2.bf16.msra.mxu0 %v1043
    %1549 = vmatprep.subr.bf16.mxu0 %v1040
    %1550 = vmatpush2.bf16.msra.mxu0 %v1039
    %1551 = vmatprep.mubr.bf16.mxu0 %v69
    %1552 = vmatmul.mubr.bf16.gmra.mxu0 %v68
    %v1553 = vpop.f32.mrf.mxu0
    %v1554 = vadd.f32 %v1513, %v1553
    %v1555 = vpop.f32.mrf.mxu0
    %v1556 = vadd.f32 %v1515, %v1555
    %v1557 = vpop.f32.mrf.mxu0
    %v1558 = vpop.f32.mrf.mxu0
    %1559 = vdwg.mxu0
    %1560 = vmatprep.subr.bf16.mxu0 0
    %1561 = vmatpush1.bf16.msra.mxu0 0
    %1562 = vmatprep.subr.bf16.mxu0 0
    %1563 = vmatpush1.bf16.msra.mxu0 0
    %1564 = vmatprep.subr.bf16.mxu0 0
    %1565 = vmatpush1.bf16.msra.mxu0 0
    %1566 = vmatprep.subr.bf16.mxu0 0
    %1567 = vmatpush1.bf16.msra.mxu0 0
    %1568 = vmatprep.subr.bf16.mxu0 0
    %1569 = vmatpush1.bf16.msra.mxu0 0
    %1570 = vmatprep.subr.bf16.mxu0 0
    %1571 = vmatpush1.bf16.msra.mxu0 0
    %1572 = vmatprep.subr.bf16.mxu0 0
    %1573 = vmatpush1.bf16.msra.mxu0 0
    %1574 = vmatprep.subr.bf16.mxu0 %v1072
    %1575 = vmatpush1.bf16.msra.mxu0 %v1071
    %1576 = vmatprep.subr.bf16.mxu0 0
    %1577 = vmatpush2.bf16.msra.mxu0 0
    %1578 = vmatprep.subr.bf16.mxu0 0
    %1579 = vmatpush2.bf16.msra.mxu0 0
    %1580 = vmatprep.subr.bf16.mxu0 0
    %1581 = vmatpush2.bf16.msra.mxu0 0
    %1582 = vmatprep.subr.bf16.mxu0 0
    %1583 = vmatpush2.bf16.msra.mxu0 0
    %1584 = vmatprep.subr.bf16.mxu0 0
    %1585 = vmatpush2.bf16.msra.mxu0 0
    %1586 = vmatprep.subr.bf16.mxu0 0
    %1587 = vmatpush2.bf16.msra.mxu0 0
    %1588 = vmatprep.subr.bf16.mxu0 0
    %1589 = vmatpush2.bf16.msra.mxu0 0
    %1590 = vmatprep.subr.bf16.mxu0 0
    %1591 = vmatpush2.bf16.msra.mxu0 0
    %1592 = vmatprep.mubr.bf16.mxu0 0
    %1593 = vmatmul.mubr.bf16.gmra.mxu0 %v1271
    %v1594 = vpop.f32.mrf.mxu0
    %v1595 = vadd.f32 %v1554, %v1594
    %v1596 = vpop.f32.mrf.mxu0
    %v1597 = vadd.f32 %v1556, %v1596
    %v1598 = vpop.f32.mrf.mxu0
    %v1599 = vpop.f32.mrf.mxu0
    %1600 = vdwg.mxu0
    %vm1601 = vcmp.gt.f32.partialorder %v1431, 0.0
    %vm1602 = vcmp.gt.f32.partialorder %v1433, 0.0
    %vm1603 = vcmp.gt.f32.partialorder %v1595, 0.0
    %vm1604 = vcmp.gt.f32.partialorder %v1597, 0.0
    %v1605 = vmul.f32 %v1431, 0.01
    %v1606 = vmul.f32 %v1433, 0.01
    %v1607 = vmul.f32 %v1595, 0.01
    %v1608 = vmul.f32 %v1597, 0.01
    %v1609 = vsel %vm1601, %v1431, %v1605
    %v1610 = vsel %vm1602, %v1433, %v1606
    %v1611 = vsel %vm1603, %v1595, %v1607
    %v1612 = vsel %vm1604, %v1597, %v1608
    %v1613 = vpack.c.bf16 %v1609, %v1609
    %v1614 = vpack.c.bf16 %v1610, %v1610
    %v1615 = vpack.c.bf16 %v1611, %v1611
    %v1616 = vpack.c.bf16 %v1612, %v1612
    %v1617 = vld [vmem:[#allocation5] sm:$0xff]
    %v1618 = vld [vmem:[#allocation5 + $0x8] sm:$0xff]
    %v1619 = vld [vmem:[#allocation5 + $0x10] sm:$0xff]
    %v1620 = vld [vmem:[#allocation5 + $0x18] sm:$0xff]
    %v1621 = vld [vmem:[#allocation5 + $0x20] sm:$0xff]
    %v1622 = vld [vmem:[#allocation5 + $0x28] sm:$0xff]
    %v1623 = vld [vmem:[#allocation5 + $0x30] sm:$0xff]
    %v1624 = vld [vmem:[#allocation5 + $0x38] sm:$0xff]
    %v1625 = vld [vmem:[#allocation5 + $0x40] sm:$0xff]
    %v1626 = vld [vmem:[#allocation5 + $0x48] sm:$0xff]
    %v1627 = vld [vmem:[#allocation5 + $0x50] sm:$0xff]
    %v1628 = vld [vmem:[#allocation5 + $0x58] sm:$0xff]
    %v1629 = vld [vmem:[#allocation5 + $0x60] sm:$0xff]
    %v1630 = vld [vmem:[#allocation5 + $0x68] sm:$0xff]
    %v1631 = vld [vmem:[#allocation5 + $0x70] sm:$0xff]
    %v1632 = vld [vmem:[#allocation5 + $0x78] sm:$0xff]
    %v1633 = vld [vmem:[#allocation5 + $0x80] sm:$0xff]
    %v1634 = vld [vmem:[#allocation5 + $0x88] sm:$0xff]
    %v1635 = vld [vmem:[#allocation5 + $0x90] sm:$0xff]
    %v1636 = vld [vmem:[#allocation5 + $0x98] sm:$0xff]
    %v1637 = vld [vmem:[#allocation5 + $0xa0] sm:$0xff]
    %v1638 = vld [vmem:[#allocation5 + $0xa8] sm:$0xff]
    %v1639 = vld [vmem:[#allocation5 + $0xb0] sm:$0xff]
    %v1640 = vld [vmem:[#allocation5 + $0xb8] sm:$0xff]
    %v1641 = vld [vmem:[#allocation5 + $0xc0] sm:$0xff]
    %v1642 = vld [vmem:[#allocation5 + $0xc8] sm:$0xff]
    %v1643 = vld [vmem:[#allocation5 + $0xd0] sm:$0xff]
    %v1644 = vld [vmem:[#allocation5 + $0xd8] sm:$0xff]
    %v1645 = vld [vmem:[#allocation5 + $0xe0] sm:$0xff]
    %v1646 = vld [vmem:[#allocation5 + $0xe8] sm:$0xff]
    %v1647 = vld [vmem:[#allocation5 + $0xf0] sm:$0xff]
    %v1648 = vld [vmem:[#allocation5 + $0xf8] sm:$0xff]
    %v1649 = vld [vmem:[#allocation5 + $0x100] sm:$0xff]
    %v1650 = vld [vmem:[#allocation5 + $0x108] sm:$0xff]
    %v1651 = vld [vmem:[#allocation5 + $0x110] sm:$0xff]
    %v1652 = vld [vmem:[#allocation5 + $0x118] sm:$0xff]
    %v1653 = vld [vmem:[#allocation5 + $0x120] sm:$0xff]
    %v1654 = vld [vmem:[#allocation5 + $0x128] sm:$0xff]
    %v1655 = vld [vmem:[#allocation5 + $0x130] sm:$0xff]
    %v1656 = vld [vmem:[#allocation5 + $0x138] sm:$0xff]
    %v1657 = vld [vmem:[#allocation5 + $0x140] sm:$0xff]
    %v1658 = vld [vmem:[#allocation5 + $0x148] sm:$0xff]
    %v1659 = vld [vmem:[#allocation5 + $0x150] sm:$0xff]
    %v1660 = vld [vmem:[#allocation5 + $0x158] sm:$0xff]
    %v1661 = vld [vmem:[#allocation5 + $0x160] sm:$0xff]
    %v1662 = vld [vmem:[#allocation5 + $0x168] sm:$0xff]
    %v1663 = vld [vmem:[#allocation5 + $0x170] sm:$0xff]
    %v1664 = vld [vmem:[#allocation5 + $0x178] sm:$0xff]
    %v1665 = vld [vmem:[#allocation5 + $0x180] sm:$0xff]
    %v1666 = vld [vmem:[#allocation5 + $0x188] sm:$0xff]
    %v1667 = vld [vmem:[#allocation5 + $0x190] sm:$0xff]
    %v1668 = vld [vmem:[#allocation5 + $0x198] sm:$0xff]
    %v1669 = vld [vmem:[#allocation5 + $0x1a0] sm:$0xff]
    %v1670 = vld [vmem:[#allocation5 + $0x1a8] sm:$0xff]
    %v1671 = vld [vmem:[#allocation5 + $0x1b0] sm:$0xff]
    %v1672 = vld [vmem:[#allocation5 + $0x1b8] sm:$0xff]
    %v1673 = vld [vmem:[#allocation5 + $0x1c0] sm:$0xff]
    %v1674 = vld [vmem:[#allocation5 + $0x1c8] sm:$0xff]
    %v1675 = vld [vmem:[#allocation5 + $0x1d0] sm:$0xff]
    %v1676 = vld [vmem:[#allocation5 + $0x1d8] sm:$0xff]
    %v1677 = vld [vmem:[#allocation5 + $0x1e0] sm:$0xff]
    %v1678 = vld [vmem:[#allocation5 + $0x1e8] sm:$0xff]
    %v1679 = vld [vmem:[#allocation5 + $0x1f0] sm:$0xff]
    %v1680 = vld [vmem:[#allocation5 + $0x1f8] sm:$0xff]
    %v1681 = vld [vmem:[%s4] sm:$0x3]
    %v1683 = vlaneseq
    %v1684 = vshrl.u32 %v1683, 7
    %v1685 = vsub.s32 0, %v1684
    %v1686 = vrot.slane %v1681, %v1685
    %v1687 = vlaneseq
    %v1688 = vshrl.u32 %v1687, 7
    %v1689 = vsub.s32 1, %v1688
    %v1690 = vrot.slane %v1681, %v1689
    %v1757 = vunpack.c.l.b16 %v1617
    %v1758 = vunpack.c.h.b16 %v1617
    %v1759 = vunpack.c.l.b16 %v1618
    %v1760 = vunpack.c.h.b16 %v1618
    %v1761 = vunpack.c.l.b16 %v1619
    %v1762 = vunpack.c.h.b16 %v1619
    %v1763 = vunpack.c.l.b16 %v1620
    %v1764 = vunpack.c.h.b16 %v1620
    %v1765 = vunpack.c.l.b16 %v1621
    %v1766 = vunpack.c.h.b16 %v1621
    %v1767 = vunpack.c.l.b16 %v1622
    %v1768 = vunpack.c.h.b16 %v1622
    %v1769 = vunpack.c.l.b16 %v1623
    %v1770 = vunpack.c.h.b16 %v1623
    %v1771 = vunpack.c.l.b16 %v1624
    %v1772 = vunpack.c.h.b16 %v1624
    %v1773 = vunpack.c.l.b16 %v1625
    %v1774 = vunpack.c.h.b16 %v1625
    %v1775 = vunpack.c.l.b16 %v1626
    %v1776 = vunpack.c.h.b16 %v1626
    %v1777 = vunpack.c.l.b16 %v1627
    %v1778 = vunpack.c.h.b16 %v1627
    %v1779 = vunpack.c.l.b16 %v1628
    %v1780 = vunpack.c.h.b16 %v1628
    %v1781 = vunpack.c.l.b16 %v1629
    %v1782 = vunpack.c.h.b16 %v1629
    %v1783 = vunpack.c.l.b16 %v1630
    %v1784 = vunpack.c.h.b16 %v1630
    %v1785 = vunpack.c.l.b16 %v1631
    %v1786 = vunpack.c.h.b16 %v1631
    %v1787 = vunpack.c.l.b16 %v1632
    %v1788 = vunpack.c.h.b16 %v1632
    %v1789 = vunpack.c.l.b16 %v1633
    %v1790 = vunpack.c.h.b16 %v1633
    %v1791 = vunpack.c.l.b16 %v1634
    %v1792 = vunpack.c.h.b16 %v1634
    %v1793 = vunpack.c.l.b16 %v1635
    %v1794 = vunpack.c.h.b16 %v1635
    %v1795 = vunpack.c.l.b16 %v1636
    %v1796 = vunpack.c.h.b16 %v1636
    %v1797 = vunpack.c.l.b16 %v1637
    %v1798 = vunpack.c.h.b16 %v1637
    %v1799 = vunpack.c.l.b16 %v1638
    %v1800 = vunpack.c.h.b16 %v1638
    %v1801 = vunpack.c.l.b16 %v1639
    %v1802 = vunpack.c.h.b16 %v1639
    %v1803 = vunpack.c.l.b16 %v1640
    %v1804 = vunpack.c.h.b16 %v1640
    %v1805 = vunpack.c.l.b16 %v1641
    %v1806 = vunpack.c.h.b16 %v1641
    %v1807 = vunpack.c.l.b16 %v1642
    %v1808 = vunpack.c.h.b16 %v1642
    %v1809 = vunpack.c.l.b16 %v1643
    %v1810 = vunpack.c.h.b16 %v1643
    %v1811 = vunpack.c.l.b16 %v1644
    %v1812 = vunpack.c.h.b16 %v1644
    %v1813 = vunpack.c.l.b16 %v1645
    %v1814 = vunpack.c.h.b16 %v1645
    %v1815 = vunpack.c.l.b16 %v1646
    %v1816 = vunpack.c.h.b16 %v1646
    %v1817 = vunpack.c.l.b16 %v1647
    %v1818 = vunpack.c.h.b16 %v1647
    %v1819 = vunpack.c.l.b16 %v1648
    %v1820 = vunpack.c.h.b16 %v1648
    %v1821 = vunpack.c.l.b16 %v1649
    %v1822 = vunpack.c.h.b16 %v1649
    %v1823 = vunpack.c.l.b16 %v1650
    %v1824 = vunpack.c.h.b16 %v1650
    %v1825 = vunpack.c.l.b16 %v1651
    %v1826 = vunpack.c.h.b16 %v1651
    %v1827 = vunpack.c.l.b16 %v1652
    %v1828 = vunpack.c.h.b16 %v1652
    %v1829 = vunpack.c.l.b16 %v1653
    %v1830 = vunpack.c.h.b16 %v1653
    %v1831 = vunpack.c.l.b16 %v1654
    %v1832 = vunpack.c.h.b16 %v1654
    %v1833 = vunpack.c.l.b16 %v1655
    %v1834 = vunpack.c.h.b16 %v1655
    %v1835 = vunpack.c.l.b16 %v1656
    %v1836 = vunpack.c.h.b16 %v1656
    %v1837 = vunpack.c.l.b16 %v1657
    %v1838 = vunpack.c.h.b16 %v1657
    %v1839 = vunpack.c.l.b16 %v1658
    %v1840 = vunpack.c.h.b16 %v1658
    %v1841 = vunpack.c.l.b16 %v1659
    %v1842 = vunpack.c.h.b16 %v1659
    %v1843 = vunpack.c.l.b16 %v1660
    %v1844 = vunpack.c.h.b16 %v1660
    %v1845 = vunpack.c.l.b16 %v1661
    %v1846 = vunpack.c.h.b16 %v1661
    %v1847 = vunpack.c.l.b16 %v1662
    %v1848 = vunpack.c.h.b16 %v1662
    %v1849 = vunpack.c.l.b16 %v1663
    %v1850 = vunpack.c.h.b16 %v1663
    %v1851 = vunpack.c.l.b16 %v1664
    %v1852 = vunpack.c.h.b16 %v1664
    %v1853 = vunpack.c.l.b16 %v1665
    %v1854 = vunpack.c.h.b16 %v1665
    %v1855 = vunpack.c.l.b16 %v1666
    %v1856 = vunpack.c.h.b16 %v1666
    %v1857 = vunpack.c.l.b16 %v1667
    %v1858 = vunpack.c.h.b16 %v1667
    %v1859 = vunpack.c.l.b16 %v1668
    %v1860 = vunpack.c.h.b16 %v1668
    %v1861 = vunpack.c.l.b16 %v1669
    %v1862 = vunpack.c.h.b16 %v1669
    %v1863 = vunpack.c.l.b16 %v1670
    %v1864 = vunpack.c.h.b16 %v1670
    %v1865 = vunpack.c.l.b16 %v1671
    %v1866 = vunpack.c.h.b16 %v1671
    %v1867 = vunpack.c.l.b16 %v1672
    %v1868 = vunpack.c.h.b16 %v1672
    %v1869 = vunpack.c.l.b16 %v1673
    %v1870 = vunpack.c.h.b16 %v1673
    %v1871 = vunpack.c.l.b16 %v1674
    %v1872 = vunpack.c.h.b16 %v1674
    %v1873 = vunpack.c.l.b16 %v1675
    %v1874 = vunpack.c.h.b16 %v1675
    %v1875 = vunpack.c.l.b16 %v1676
    %v1876 = vunpack.c.h.b16 %v1676
    %v1877 = vunpack.c.l.b16 %v1677
    %v1878 = vunpack.c.h.b16 %v1677
    %v1879 = vunpack.c.l.b16 %v1678
    %v1880 = vunpack.c.h.b16 %v1678
    %v1881 = vunpack.c.l.b16 %v1679
    %v1882 = vunpack.c.h.b16 %v1679
    %v1883 = vunpack.c.l.b16 %v1680
    %v1884 = vunpack.c.h.b16 %v1680
    %v1885 = vpack.c.b16 %v1759, %v1757
    %v1886 = vpack.c.b16 %v1760, %v1758
    %v1887 = vpack.c.b16 %v1763, %v1761
    %v1888 = vpack.c.b16 %v1764, %v1762
    %v1889 = vpack.c.b16 %v1767, %v1765
    %v1890 = vpack.c.b16 %v1768, %v1766
    %v1891 = vpack.c.b16 %v1771, %v1769
    %v1892 = vpack.c.b16 %v1772, %v1770
    %v1893 = vpack.c.b16 %v1775, %v1773
    %v1894 = vpack.c.b16 %v1776, %v1774
    %v1895 = vpack.c.b16 %v1779, %v1777
    %v1896 = vpack.c.b16 %v1780, %v1778
    %v1897 = vpack.c.b16 %v1783, %v1781
    %v1898 = vpack.c.b16 %v1784, %v1782
    %v1899 = vpack.c.b16 %v1787, %v1785
    %v1900 = vpack.c.b16 %v1788, %v1786
    %v1901 = vpack.c.b16 %v1791, %v1789
    %v1902 = vpack.c.b16 %v1792, %v1790
    %v1903 = vpack.c.b16 %v1795, %v1793
    %v1904 = vpack.c.b16 %v1796, %v1794
    %v1905 = vpack.c.b16 %v1799, %v1797
    %v1906 = vpack.c.b16 %v1800, %v1798
    %v1907 = vpack.c.b16 %v1803, %v1801
    %v1908 = vpack.c.b16 %v1804, %v1802
    %v1909 = vpack.c.b16 %v1807, %v1805
    %v1910 = vpack.c.b16 %v1808, %v1806
    %v1911 = vpack.c.b16 %v1811, %v1809
    %v1912 = vpack.c.b16 %v1812, %v1810
    %v1913 = vpack.c.b16 %v1815, %v1813
    %v1914 = vpack.c.b16 %v1816, %v1814
    %v1915 = vpack.c.b16 %v1819, %v1817
    %v1916 = vpack.c.b16 %v1820, %v1818
    %v1917 = vpack.c.b16 %v1823, %v1821
    %v1918 = vpack.c.b16 %v1824, %v1822
    %v1919 = vpack.c.b16 %v1827, %v1825
    %v1920 = vpack.c.b16 %v1828, %v1826
    %v1921 = vpack.c.b16 %v1831, %v1829
    %v1922 = vpack.c.b16 %v1832, %v1830
    %v1923 = vpack.c.b16 %v1835, %v1833
    %v1924 = vpack.c.b16 %v1836, %v1834
    %v1925 = vpack.c.b16 %v1839, %v1837
    %v1926 = vpack.c.b16 %v1840, %v1838
    %v1927 = vpack.c.b16 %v1843, %v1841
    %v1928 = vpack.c.b16 %v1844, %v1842
    %v1929 = vpack.c.b16 %v1847, %v1845
    %v1930 = vpack.c.b16 %v1848, %v1846
    %v1931 = vpack.c.b16 %v1851, %v1849
    %v1932 = vpack.c.b16 %v1852, %v1850
    %v1933 = vpack.c.b16 %v1855, %v1853
    %v1934 = vpack.c.b16 %v1856, %v1854
    %v1935 = vpack.c.b16 %v1859, %v1857
    %v1936 = vpack.c.b16 %v1860, %v1858
    %v1937 = vpack.c.b16 %v1863, %v1861
    %v1938 = vpack.c.b16 %v1864, %v1862
    %v1939 = vpack.c.b16 %v1867, %v1865
    %v1940 = vpack.c.b16 %v1868, %v1866
    %v1941 = vpack.c.b16 %v1871, %v1869
    %v1942 = vpack.c.b16 %v1872, %v1870
    %v1943 = vpack.c.b16 %v1875, %v1873
    %v1944 = vpack.c.b16 %v1876, %v1874
    %v1945 = vpack.c.b16 %v1879, %v1877
    %v1946 = vpack.c.b16 %v1880, %v1878
    %v1947 = vpack.c.b16 %v1883, %v1881
    %v1948 = vpack.c.b16 %v1884, %v1882
    %2013 = vmatprep.subr.bf16.mxu0 %v1900
    %2014 = vmatpush1.bf16.msra.mxu0 %v1899
    %2015 = vmatprep.subr.bf16.mxu0 %v1898
    %2016 = vmatpush1.bf16.msra.mxu0 %v1897
    %2017 = vmatprep.subr.bf16.mxu0 %v1896
    %2018 = vmatpush1.bf16.msra.mxu0 %v1895
    %2019 = vmatprep.subr.bf16.mxu0 %v1894
    %2020 = vmatpush1.bf16.msra.mxu0 %v1893
    %2021 = vmatprep.subr.bf16.mxu0 %v1892
    %2022 = vmatpush1.bf16.msra.mxu0 %v1891
    %2023 = vmatprep.subr.bf16.mxu0 %v1890
    %2024 = vmatpush1.bf16.msra.mxu0 %v1889
    %2025 = vmatprep.subr.bf16.mxu0 %v1888
    %2026 = vmatpush1.bf16.msra.mxu0 %v1887
    %2027 = vmatprep.subr.bf16.mxu0 %v1886
    %2028 = vmatpush1.bf16.msra.mxu0 %v1885
    %2029 = vmatprep.subr.bf16.mxu0 %v1916
    %2030 = vmatpush2.bf16.msra.mxu0 %v1915
    %2031 = vmatprep.subr.bf16.mxu0 %v1914
    %2032 = vmatpush2.bf16.msra.mxu0 %v1913
    %2033 = vmatprep.subr.bf16.mxu0 %v1912
    %2034 = vmatpush2.bf16.msra.mxu0 %v1911
    %2035 = vmatprep.subr.bf16.mxu0 %v1910
    %2036 = vmatpush2.bf16.msra.mxu0 %v1909
    %2037 = vmatprep.subr.bf16.mxu0 %v1908
    %2038 = vmatpush2.bf16.msra.mxu0 %v1907
    %2039 = vmatprep.subr.bf16.mxu0 %v1906
    %2040 = vmatpush2.bf16.msra.mxu0 %v1905
    %2041 = vmatprep.subr.bf16.mxu0 %v1904
    %2042 = vmatpush2.bf16.msra.mxu0 %v1903
    %2043 = vmatprep.subr.bf16.mxu0 %v1902
    %2044 = vmatpush2.bf16.msra.mxu0 %v1901
    %2045 = vmatprep.mubr.bf16.mxu0 %v1614
    %2046 = vmatmul.mubr.bf16.gmra.mxu0 %v1613
    %v2047 = vpop.f32.mrf.mxu0
    %v2048 = vadd.f32 %v1686, %v2047
    %v2049 = vpop.f32.mrf.mxu0
    %v2050 = vadd.f32 %v1690, %v2049
    %v2051 = vpop.f32.mrf.mxu0
    %v2052 = vpop.f32.mrf.mxu0
    %2053 = vdwg.mxu0
    %2054 = vmatprep.subr.bf16.mxu0 %v1932
    %2055 = vmatpush1.bf16.msra.mxu0 %v1931
    %2056 = vmatprep.subr.bf16.mxu0 %v1930
    %2057 = vmatpush1.bf16.msra.mxu0 %v1929
    %2058 = vmatprep.subr.bf16.mxu0 %v1928
    %2059 = vmatpush1.bf16.msra.mxu0 %v1927
    %2060 = vmatprep.subr.bf16.mxu0 %v1926
    %2061 = vmatpush1.bf16.msra.mxu0 %v1925
    %2062 = vmatprep.subr.bf16.mxu0 %v1924
    %2063 = vmatpush1.bf16.msra.mxu0 %v1923
    %2064 = vmatprep.subr.bf16.mxu0 %v1922
    %2065 = vmatpush1.bf16.msra.mxu0 %v1921
    %2066 = vmatprep.subr.bf16.mxu0 %v1920
    %2067 = vmatpush1.bf16.msra.mxu0 %v1919
    %2068 = vmatprep.subr.bf16.mxu0 %v1918
    %2069 = vmatpush1.bf16.msra.mxu0 %v1917
    %2070 = vmatprep.subr.bf16.mxu0 %v1948
    %2071 = vmatpush2.bf16.msra.mxu0 %v1947
    %2072 = vmatprep.subr.bf16.mxu0 %v1946
    %2073 = vmatpush2.bf16.msra.mxu0 %v1945
    %2074 = vmatprep.subr.bf16.mxu0 %v1944
    %2075 = vmatpush2.bf16.msra.mxu0 %v1943
    %2076 = vmatprep.subr.bf16.mxu0 %v1942
    %2077 = vmatpush2.bf16.msra.mxu0 %v1941
    %2078 = vmatprep.subr.bf16.mxu0 %v1940
    %2079 = vmatpush2.bf16.msra.mxu0 %v1939
    %2080 = vmatprep.subr.bf16.mxu0 %v1938
    %2081 = vmatpush2.bf16.msra.mxu0 %v1937
    %2082 = vmatprep.subr.bf16.mxu0 %v1936
    %2083 = vmatpush2.bf16.msra.mxu0 %v1935
    %2084 = vmatprep.subr.bf16.mxu0 %v1934
    %2085 = vmatpush2.bf16.msra.mxu0 %v1933
    %2086 = vmatprep.mubr.bf16.mxu0 %v1616
    %2087 = vmatmul.mubr.bf16.gmra.mxu0 %v1615
    %v2088 = vpop.f32.mrf.mxu0
    %v2089 = vadd.f32 %v2048, %v2088
    %v2090 = vpop.f32.mrf.mxu0
    %v2091 = vadd.f32 %v2050, %v2090
    %v2092 = vpop.f32.mrf.mxu0
    %v2093 = vpop.f32.mrf.mxu0
    %2094 = vdwg.mxu0
    %vm2095 = vcmp.gt.f32.partialorder %v2089, 0.0
    %vm2096 = vcmp.gt.f32.partialorder %v2091, 0.0
    %v2097 = vmul.f32 %v2089, 0.01
    %v2098 = vmul.f32 %v2091, 0.01
    %v2099 = vsel %vm2095, %v2089, %v2097
    %v2100 = vsel %vm2096, %v2091, %v2098
    %v2101 = vld [vmem:[%s5] sm:$0x3]
    %v2103 = vlaneseq
    %v2104 = vshrl.u32 %v2103, 7
    %v2105 = vsub.s32 0, %v2104
    %v2106 = vrot.slane %v2101, %v2105
    %v2107 = vlaneseq
    %v2108 = vshrl.u32 %v2107, 7
    %v2109 = vsub.s32 1, %v2108
    %v2110 = vrot.slane %v2101, %v2109
    %v2113 = vmul.f32 %v2099, %v2106
    %v2114 = vmul.f32 %v2100, %v2110
    %v2115 = vadd.f32 %v2113, %v2114
    %2116 = vadd.xlane.f32.xlu0 %v2115
    %v2117 = vpop.xlane.xlu0 %2116
    %v2118 = vld [vmem:[#allocation2] sm:$0x1]
    %v2120 = vlaneseq
    %v2121 = vshrl.u32 %v2120, 7
    %v2122 = vsub.s32 0, %v2121
    %v2123 = vrot.slane %v2118, %v2122
    %v2125 = vadd.f32 %v2117, %v2123
    %v2126 = vxor.u32 %v2125, 2147483648
    %v2127 = vmul.f32 %v2126, 1.442695
    %v2128 = vpow.pop %v2127
    %v2129 = vadd.f32 %v2128, 1.0
    %v2130 = vrcp.pop %v2129
    %v2131 = vmul.f32 1.0, %v2130
    %vm2132 = vcmask 7168
    %2133 = vst.msk [vmem:[%s7] sm:$0xff] %vm2132, %v2131
    // Predicated region
    $region38: #{discriminator_forward.1} parent=1 // pred_check
      _
    $region39: #{discriminator_forward.1} parent=1 // pred_check_branch
      %2135 = sbr.rel (0) target = $region41
    $region40: #{discriminator_forward.1} parent=1 // pred_region
      _
    $region41: #{discriminator_forward.1} parent=1 // pred_fallthru
      _
    // Predicated region
    $region42: #{discriminator_forward.1} parent=1 // pred_check
      _
    $region43: #{discriminator_forward.1} parent=1 // pred_check_branch
      %2137 = sbr.rel (0) target = $region45
    $region44: #{discriminator_forward.1} parent=1 // pred_region
      _
    $region45: #{discriminator_forward.1} parent=1 // pred_fallthru
      _
    %2138 = vsyncpa [#allocation4], 1
    %2139 = vsyncpa [#allocation6], 1

</llo_original>
